<compile_context>
chip_gen: v5e
topology: v5e:2x2
jax: 0.10.0
libtpu: 0.0.40
codegen_flags: <defaults>
</compile_context>

<pallas_src>
import functools

import numpy as np
import jax
import jax.numpy as jnp
from jax import lax
from jax.experimental import pallas as pl
from jax.experimental.pallas import tpu as pltpu

EXPANSION = 4
BN_EPS = 1e-5
LANE = 128
SUBLANE = 8
VMEM_LIMIT = 48 * 1024 * 1024   # leave headroom vs v7x's 64 MiB/TC


def _round_up(a, b):
    return (a + b - 1) // b * b


def _pad_axis(x, axis, size):
    if x.shape[axis] == size:
        return x
    pads = [(0, 0)] * x.ndim
    pads[axis] = (0, size - x.shape[axis])
    return jnp.pad(x, pads)


# ----------------------------- Pallas kernels ------------------------------

def _mm_bn_act_kernel(x_ref, w_ref, s_ref, b_ref, o_ref, acc_ref, *, apply_relu):
    """Tiled (x @ w); BN scale/bias (+ optional ReLU) applied on finalize."""
    @pl.when(pl.program_id(1) == 0)
    def _():
        acc_ref[...] = jnp.zeros_like(acc_ref)

    acc_ref[...] += jnp.dot(x_ref[...], w_ref[...],
                            preferred_element_type=jnp.float32)

    @pl.when(pl.program_id(1) == pl.num_programs(1) - 1)
    def _():
        y = acc_ref[...] * s_ref[...] + b_ref[...]
        if apply_relu:
            y = jnp.maximum(y, 0.0)
        o_ref[...] = y.astype(o_ref.dtype)


def _conv3x3_bn_relu_kernel(x_ref, w_ref, s_ref, b_ref, o_ref, *, stride, Ho, Wq):
    """Fused 3x3 conv + BN + ReLU on a phase-decomposed, spatially-flat slab.

    x_ref: (1, s, s, L, Cin_p) bf16 slab (L = Hq*Wq + tail, zero padded)
    w_ref: (3, 3, Cin_p, Cout_p) bf16 ; s_ref/b_ref: (1, Cout_p) f32
    o_ref: (1, Ho*Wq, Cout_p)
    """
    n_out = o_ref.shape[-1]
    m = Ho * Wq
    acc = jnp.zeros((m, n_out), jnp.float32)
    for dy in range(3):
        for dx in range(3):
            py, oy = dy % stride, dy // stride
            px, ox = dx % stride, dx // stride
            start = oy * Wq + ox
            win = x_ref[0, py, px, start:start + m, :]        # (m, Cin_p)
            acc = acc + jnp.dot(win, w_ref[dy, dx],
                                preferred_element_type=jnp.float32)
    y = acc * s_ref[...] + b_ref[...]
    o_ref[0] = jnp.maximum(y, 0.0).astype(o_ref.dtype)


def _conv3_sc_res_kernel(h_ref, w3_ref, s3_ref, b3_ref,
                         xs_ref, wsc_ref, ssc_ref, bsc_ref, *out_refs):
    """Fused conv3(1x1)+bn3 + projection-shortcut(1x1)+bn + add + ReLU."""
    y = jnp.dot(h_ref[...], w3_ref[...], preferred_element_type=jnp.float32)
    y = y * s3_ref[...] + b3_ref[...]
    z = jnp.dot(xs_ref[...], wsc_ref[...], preferred_element_type=jnp.float32)
    y = y + z * ssc_ref[...] + bsc_ref[...]
    if len(out_refs) == 2:
        out_ref, pre_ref = out_refs
        pre_ref[...] = y.astype(pre_ref.dtype)
    else:
        (out_ref,) = out_refs
    out_ref[...] = jnp.maximum(y, 0.0).astype(out_ref.dtype)


def _conv3_id_res_kernel(h_ref, w3_ref, s3_ref, b3_ref, r_ref, *out_refs):
    """Fused conv3(1x1)+bn3 + identity shortcut + add + ReLU."""
    y = jnp.dot(h_ref[...], w3_ref[...], preferred_element_type=jnp.float32)
    y = y * s3_ref[...] + b3_ref[...] + r_ref[...]
    if len(out_refs) == 2:
        out_ref, pre_ref = out_refs
        pre_ref[...] = y.astype(pre_ref.dtype)
    else:
        (out_ref,) = out_refs
    out_ref[...] = jnp.maximum(y, 0.0).astype(out_ref.dtype)


# ----------------------------- kernel wrappers ------------------------------

def matmul_bn_act(x, w, scale, bias, *, apply_relu, out_dtype, tm=256, tk=512):
    """(x @ w) * scale + bias [+ ReLU], tiled over M and the reduction K."""
    M, K = x.shape
    _, Np = w.shape
    tm = min(tm, M)
    tk = min(tk, K)
    if K % tk != 0:
        tk = 128 if K % 128 == 0 else K
    assert M % tm == 0 and K % tk == 0
    grid = (M // tm, K // tk)

    flops = 2 * M * K * Np
    bytes_accessed = ((M * K + K * Np) * x.dtype.itemsize
                      + M * Np * jnp.dtype(out_dtype).itemsize)

    return pl.pallas_call(
        functools.partial(_mm_bn_act_kernel, apply_relu=apply_relu),
        out_shape=jax.ShapeDtypeStruct((M, Np), out_dtype),
        grid=grid,
        in_specs=[
            pl.BlockSpec((tm, tk), lambda i, k: (i, k)),
            pl.BlockSpec((tk, Np), lambda i, k: (k, 0)),   # resident across M
            pl.BlockSpec((1, Np), lambda i, k: (0, 0)),
            pl.BlockSpec((1, Np), lambda i, k: (0, 0)),
        ],
        out_specs=pl.BlockSpec((tm, Np), lambda i, k: (i, 0)),
        scratch_shapes=[pltpu.VMEM((tm, Np), jnp.float32)],
        compiler_params=pltpu.CompilerParams(
            dimension_semantics=("parallel", "arbitrary"),
            vmem_limit_bytes=VMEM_LIMIT),
        cost_estimate=pl.CostEstimate(flops=flops, transcendentals=0,
                                      bytes_accessed=bytes_accessed),
    )(x, w, scale, bias)


def conv3x3_bn_relu(h_nhwc, w2, scale, bias, *, stride):
    """Fused 3x3 conv (pad=1, stride) + BN + ReLU.

    h_nhwc: (N, H, W, Cin_p) bf16 ; w2: (3,3,Cin_p,Cout_p) bf16.
    Returns (N, Ho, Wo, Cout_p) bf16.
    """
    N, H, W, Cp = h_nhwc.shape
    Np = w2.shape[-1]
    Ho = (H + 2 - 3) // stride + 1
    Wo = (W + 2 - 3) // stride + 1
    halo = 2 // stride
    Wq = _round_up(Wo + halo, SUBLANE)      # compute width incl. horizontal halo
    Hq = Ho + halo
    Hp, Wp = stride * Hq, stride * Wq

    # zero-pad (conv padding=1 + alignment), crop any unread excess.
    xp = jnp.pad(h_nhwc, ((0, 0),
                          (1, max(Hp - H - 1, 1)),
                          (1, max(Wp - W - 1, 1)),
                          (0, 0)))[:, :Hp, :Wp, :]
    # stride-phase decomposition + spatial flatten (single ~1x-traffic slab).
    xph = xp.reshape(N, Hq, stride, Wq, stride, Cp).transpose(0, 2, 4, 1, 3, 5)
    L = Hq * Wq + SUBLANE                   # tail so shifted windows stay in bounds
    xph = _pad_axis(xph.reshape(N, stride, stride, Hq * Wq, Cp), 3, L)

    m = Ho * Wq
    flops = 2 * N * m * 9 * Cp * Np
    bytes_accessed = (xph.size + w2.size + N * m * Np) * 2

    out = pl.pallas_call(
        functools.partial(_conv3x3_bn_relu_kernel, stride=stride, Ho=Ho, Wq=Wq),
        out_shape=jax.ShapeDtypeStruct((N, m, Np), jnp.bfloat16),
        grid=(N,),
        in_specs=[
            pl.BlockSpec((1, stride, stride, L, Cp),
                         lambda n: (n, 0, 0, 0, 0)),
            pl.BlockSpec((3, 3, Cp, Np), lambda n: (0, 0, 0, 0)),
            pl.BlockSpec((1, Np), lambda n: (0, 0)),
            pl.BlockSpec((1, Np), lambda n: (0, 0)),
        ],
        out_specs=pl.BlockSpec((1, m, Np), lambda n: (n, 0, 0)),
        compiler_params=pltpu.CompilerParams(
            dimension_semantics=("parallel",),
            vmem_limit_bytes=VMEM_LIMIT),
        cost_estimate=pl.CostEstimate(flops=flops, transcendentals=0,
                                      bytes_accessed=bytes_accessed),
    )(xph, w2, scale, bias)

    return out.reshape(N, Ho, Wq, Np)[:, :, :Wo, :]


def conv3_residual(h2, w3, s3, b3, shortcut, *, out_dtype, emit_preact, tm=256):
    """Fused conv3(1x1)+bn3 + shortcut + residual add + ReLU (preact optional)."""
    M, Kp = h2.shape
    _, Cop = w3.shape
    tm = min(tm, M)
    assert M % tm == 0
    grid = (M // tm,)

    if shortcut[0] == 'conv':
        _, xs, wsc, ssc, bsc = shortcut
        Kc = xs.shape[1]
        kernel = _conv3_sc_res_kernel
        args = (h2, w3, s3, b3, xs, wsc, ssc, bsc)
        in_specs = [
            pl.BlockSpec((tm, Kp), lambda i: (i, 0)),
            pl.BlockSpec((Kp, Cop), lambda i: (0, 0)),
            pl.BlockSpec((1, Cop), lambda i: (0, 0)),
            pl.BlockSpec((1, Cop), lambda i: (0, 0)),
            pl.BlockSpec((tm, Kc), lambda i: (i, 0)),
            pl.BlockSpec((Kc, Cop), lambda i: (0, 0)),
            pl.BlockSpec((1, Cop), lambda i: (0, 0)),
            pl.BlockSpec((1, Cop), lambda i: (0, 0)),
        ]
        flops = 2 * M * (Kp + Kc) * Cop
    else:
        _, r = shortcut
        kernel = _conv3_id_res_kernel
        args = (h2, w3, s3, b3, r)
        in_specs = [
            pl.BlockSpec((tm, Kp), lambda i: (i, 0)),
            pl.BlockSpec((Kp, Cop), lambda i: (0, 0)),
            pl.BlockSpec((1, Cop), lambda i: (0, 0)),
            pl.BlockSpec((1, Cop), lambda i: (0, 0)),
            pl.BlockSpec((tm, Cop), lambda i: (i, 0)),
        ]
        flops = 2 * M * Kp * Cop

    n_out = 2 if emit_preact else 1
    out_shape = tuple(jax.ShapeDtypeStruct((M, Cop), out_dtype) for _ in range(n_out))
    out_specs = tuple(pl.BlockSpec((tm, Cop), lambda i: (i, 0)) for _ in range(n_out))
    bytes_accessed = (sum(int(a.size) * a.dtype.itemsize for a in args)
                      + n_out * M * Cop * jnp.dtype(out_dtype).itemsize)

    res = pl.pallas_call(
        kernel,
        out_shape=out_shape,
        grid=grid,
        in_specs=in_specs,
        out_specs=out_specs,
        compiler_params=pltpu.CompilerParams(
            dimension_semantics=("parallel",),
            vmem_limit_bytes=VMEM_LIMIT),
        cost_estimate=pl.CostEstimate(flops=flops, transcendentals=0,
                                      bytes_accessed=bytes_accessed),
    )(*args)
    return (res[0], res[1]) if emit_preact else (res[0], None)


# ------------------------------ JAX glue ------------------------------------

def fold_bn(bn, cpad):
    gamma, beta, mean, var = bn
    scale = gamma / jnp.sqrt(var + BN_EPS)
    bias = beta - mean * scale
    scale = _pad_axis(scale, 0, cpad).reshape(1, cpad).astype(jnp.float32)
    bias = _pad_axis(bias, 0, cpad).reshape(1, cpad).astype(jnp.float32)
    return scale, bias


def _bottleneck_forward(x_nchw, params, *, stride, is_last):
    x = jnp.transpose(x_nchw, (0, 2, 3, 1))          # NCHW -> NHWC
    N, H, W, Cin = x.shape
    P = params['w1'].shape[1]
    Cout = EXPANSION * P

    Cinp = _round_up(Cin, LANE)
    Pp = _round_up(P, LANE)
    Coutp = _round_up(Cout, LANE)

    s1, b1 = fold_bn(params['bn1'], Pp)
    s2, b2 = fold_bn(params['bn2'], Pp)
    s3, b3 = fold_bn(params['bn3'], Coutp)

    w1 = _pad_axis(_pad_axis(params['w1'], 0, Cinp), 1, Pp).astype(jnp.bfloat16)
    w2 = _pad_axis(_pad_axis(params['w2'], 2, Pp), 3, Pp).astype(jnp.bfloat16)
    w3 = _pad_axis(_pad_axis(params['w3'], 0, Pp), 1, Coutp).astype(jnp.bfloat16)

    xpad = _pad_axis(x, 3, Cinp)                     # NHWC, channels padded

    # ---- conv1 (1x1) + bn1 + relu (tiled matmul) ---------------------------
    M1 = N * H * W
    tm1 = min(256, _round_up(M1, SUBLANE))
    M1p = _round_up(M1, tm1)
    x1 = _pad_axis(xpad.reshape(M1, Cinp), 0, M1p).astype(jnp.bfloat16)
    h1 = matmul_bn_act(x1, w1, s1, b1, apply_relu=True,
                       out_dtype=jnp.bfloat16, tm=tm1)
    h1 = h1[:M1].reshape(N, H, W, Pp)

    # ---- conv2 (3x3, stride, pad=1) + bn2 + relu (fused, no im2col) --------
    h2 = conv3x3_bn_relu(h1, w2, s2, b2, stride=stride)   # (N,Ho,Wo,Pp) bf16
    _, Ho, Wo, _ = h2.shape

    # ---- conv3 (1x1) + bn3 + shortcut + residual + relu (fused) ------------
    M3 = N * Ho * Wo
    tm3 = min(256, _round_up(M3, SUBLANE))
    M3p = _round_up(M3, tm3)
    h2f = _pad_axis(h2.reshape(M3, Pp), 0, M3p)

    if params['wsc'] is not None:
        ssc, bsc = fold_bn(params['bnsc'], Coutp)
        wsc = _pad_axis(_pad_axis(params['wsc'], 0, Cinp), 1, Coutp).astype(jnp.bfloat16)
        xs = xpad[:, ::stride, ::stride, :].reshape(M3, Cinp)
        xs = _pad_axis(xs, 0, M3p).astype(jnp.bfloat16)
        shortcut = ('conv', xs, wsc, ssc, bsc)
    else:
        r = _pad_axis(xpad.reshape(M1, Cinp), 0, M3p).astype(jnp.float32)
        shortcut = ('identity', r)

    out2d, pre2d = conv3_residual(h2f, w3, s3, b3, shortcut,
                                  out_dtype=jnp.float32,
                                  emit_preact=is_last, tm=tm3)

    out = jnp.transpose(out2d[:M3, :Cout].reshape(N, Ho, Wo, Cout), (0, 3, 1, 2))
    if is_last:
        pre = jnp.transpose(pre2d[:M3, :Cout].reshape(N, Ho, Wo, Cout), (0, 3, 1, 2))
        return out, pre
    return out


bottleneck_forward = jax.jit(_bottleneck_forward,
                             static_argnames=("stride", "is_last"))


# -------------------------- deterministic params ----------------------------

def init_params(key, in_planes, planes, stride):
    cout = EXPANSION * planes
    ks = jax.random.split(key, 8)

    def bn(k, c):
        k1, k2, k3, k4 = jax.random.split(k, 4)
        gamma = 1.0 + 0.1 * jax.random.normal(k1, (c,), jnp.float32)
        beta = 0.1 * jax.random.normal(k2, (c,), jnp.float32)
        mean = 0.05 * jax.random.normal(k3, (c,), jnp.float32)
        var = 1.0 + 0.1 * jax.random.uniform(k4, (c,), jnp.float32)
        return (gamma, beta, mean, var)

    params = {
        'w1': 0.2 * jax.random.normal(ks[0], (in_planes, planes), jnp.float32),
        'bn1': bn(ks[1], planes),
        'w2': 0.2 * jax.random.normal(ks[2], (3, 3, planes, planes), jnp.float32),
        'bn2': bn(ks[3], planes),
        'w3': 0.2 * jax.random.normal(ks[4], (planes, cout), jnp.float32),
        'bn3': bn(ks[5], cout),
        'wsc': None,
        'bnsc': None,
    }
    if stride != 1 or in_planes != cout:
        params['wsc'] = 0.2 * jax.random.normal(ks[6], (in_planes, cout), jnp.float32)
        params['bnsc'] = bn(ks[7], cout)
    return params


# ------------------------- plain-JAX reference ------------------------------

def reference_forward(x_nchw, params, *, stride, is_last):
    x = jnp.transpose(x_nchw, (0, 2, 3, 1))

    def conv(h, w_hwio, strides, padding):
        return lax.conv_general_dilated(
            h, w_hwio, window_strides=strides, padding=padding,
            dimension_numbers=('NHWC', 'HWIO', 'NHWC'))

    def bn_apply(y, bnp):
        gamma, beta, mean, var = bnp
        return (y - mean) / jnp.sqrt(var + BN_EPS) * gamma + beta

    h = jax.nn.relu(bn_apply(conv(x, params['w1'][None, None], (1, 1), 'VALID'),
                             params['bn1']))
    h = jax.nn.relu(bn_apply(conv(h, params['w2'], (stride, stride),
                                  ((1, 1), (1, 1))), params['bn2']))
    h = bn_apply(conv(h, params['w3'][None, None], (1, 1), 'VALID'), params['bn3'])
    if params['wsc'] is not None:
        sc = bn_apply(conv(x, params['wsc'][None, None], (stride, stride), 'VALID'),
                      params['bnsc'])
    else:
        sc = x
    pre = h + sc
    out = jax.nn.relu(pre)
    out = jnp.transpose(out, (0, 3, 1, 2))
    pre = jnp.transpose(pre, (0, 3, 1, 2))
    return (out, pre) if is_last else out


# ---------------------------------- main -------------------------------------

if __name__ == "__main__":
    key = jax.random.PRNGKey(0)
    k1, k2, k3, k4 = jax.random.split(key, 4)

    # Config 1: projection shortcut (stride=2, channel expansion), is_last=True.
    in_planes, planes, stride = 4, 4, 2
    x = jax.random.normal(k1, (2, in_planes, 8, 8), jnp.float32)   # NCHW
    params = init_params(k2, in_planes, planes, stride)

    out, preact = bottleneck_forward(x, params, stride=stride, is_last=True)
    jax.block_until_ready((out, preact))

    ref_out, ref_pre = reference_forward(x, params, stride=stride, is_last=True)
    assert out.shape == (2, EXPANSION * planes, 4, 4)
    assert np.allclose(np.asarray(out), np.asarray(ref_out), atol=5e-2, rtol=5e-2)
    assert np.allclose(np.asarray(preact), np.asarray(ref_pre), atol=5e-2, rtol=5e-2)

    # Config 2: identity shortcut (stride=1, in_planes == 4*planes), is_last=False.
    in_planes2, planes2, stride2 = 16, 4, 1
    x2 = jax.random.normal(k3, (2, in_planes2, 8, 8), jnp.float32)
    params2 = init_params(k4, in_planes2, planes2, stride2)

    out2 = bottleneck_forward(x2, params2, stride=stride2, is_last=False)
    jax.block_until_ready(out2)

    ref_out2 = reference_forward(x2, params2, stride=stride2, is_last=False)
    assert out2.shape == (2, EXPANSION * planes2, 8, 8)
    assert np.allclose(np.asarray(out2), np.asarray(ref_out2), atol=5e-2, rtol=5e-2)

    print("KERNEL_OK")
</pallas_src>

<mosaic_0001>
module attributes {stable_mosaic.version = 11 : i64} {
  func.func @_mm_bn_act_kernel(%arg0: i32, %arg1: i32, %arg2: memref<128x128xbf16, #tpu.memory_space<vmem>>, %arg3: memref<128x128xbf16, #tpu.memory_space<vmem>>, %arg4: memref<1x128xf32, #tpu.memory_space<vmem>>, %arg5: memref<1x128xf32, #tpu.memory_space<vmem>>, %arg6: memref<128x128xbf16, #tpu.memory_space<vmem>>, %arg7: memref<128x128xf32, #tpu.memory_space<vmem>>) attributes {dimension_semantics = [#tpu.dimension_semantics<parallel>, #tpu.dimension_semantics<arbitrary>], iteration_bounds = array<i64: 1, 1>, scalar_prefetch = 0 : i64, scratch_operands = 1 : i64, tpu.core_type = #tpu.core_type<tc>, window_params = [{transform_indices = @transform_0, window_bounds = array<i64: 128, 128>}, {transform_indices = @transform_1, window_bounds = array<i64: 128, 128>}, {pipeline_mode = #tpu.pipeline_mode<synchronous>, transform_indices = @transform_2, window_bounds = array<i64: 1, 128>}, {pipeline_mode = #tpu.pipeline_mode<synchronous>, transform_indices = @transform_3, window_bounds = array<i64: 1, 128>}, {transform_indices = @transform_4, window_bounds = array<i64: 128, 128>}]} {
    %c0_i32 = arith.constant 0 : i32
    %0 = arith.cmpi eq, %arg1, %c0_i32 : i32
    %1 = arith.extui %0 : i1 to i32
    %c0_i32_0 = arith.constant 0 : i32
    %2 = arith.cmpi ne, %1, %c0_i32_0 : i32
    scf.if %2 {
      %cst_10 = arith.constant 0.000000e+00 : f32
      %12 = vector.broadcast %cst_10 : f32 to vector<128x128xf32>
      %c0_11 = arith.constant 0 : index
      %c0_12 = arith.constant 0 : index
      %13 = vector.load %arg7[%c0_11, %c0_12] : memref<128x128xf32, #tpu.memory_space<vmem>>, vector<128x128xf32>
      tpu.vector_store %arg7[%c0_11, %c0_12], %12 {strides = array<i32>} : memref<128x128xf32, #tpu.memory_space<vmem>>, vector<128x128xf32>,
    } else {
    }
    %c0 = arith.constant 0 : index
    %c0_1 = arith.constant 0 : index
    %3 = vector.load %arg7[%c0, %c0_1] : memref<128x128xf32, #tpu.memory_space<vmem>>, vector<128x128xf32>
    %c0_2 = arith.constant 0 : index
    %c0_3 = arith.constant 0 : index
    %4 = vector.load %arg2[%c0_2, %c0_3] : memref<128x128xbf16, #tpu.memory_space<vmem>>, vector<128x128xbf16>
    %c0_4 = arith.constant 0 : index
    %c0_5 = arith.constant 0 : index
    %5 = vector.load %arg3[%c0_4, %c0_5] : memref<128x128xbf16, #tpu.memory_space<vmem>>, vector<128x128xbf16>
    %cst = arith.constant dense<0.000000e+00> : vector<128x128xf32>
    %6 = tpu.matmul %4, %5, %cst {dimension_numbers = #tpu.dot_dimension_numbers<[1], [0], [0], [1], [0, 0, 1, 1], [], []>} : vector<128x128xbf16>, vector<128x128xbf16>, vector<128x128xf32> -> vector<128x128xf32>
    %7 = arith.addf %3, %6 : vector<128x128xf32>
    %c0_6 = arith.constant 0 : index
    %c0_7 = arith.constant 0 : index
    %8 = vector.load %arg7[%c0_6, %c0_7] : memref<128x128xf32, #tpu.memory_space<vmem>>, vector<128x128xf32>
    tpu.vector_store %arg7[%c0_6, %c0_7], %7 {strides = array<i32>} : memref<128x128xf32, #tpu.memory_space<vmem>>, vector<128x128xf32>,
    %c0_i32_8 = arith.constant 0 : i32
    %9 = arith.cmpi eq, %arg1, %c0_i32_8 : i32
    %10 = arith.extui %9 : i1 to i32
    %c0_i32_9 = arith.constant 0 : i32
    %11 = arith.cmpi ne, %10, %c0_i32_9 : i32
    scf.if %11 {
      %c0_10 = arith.constant 0 : index
      %c0_11 = arith.constant 0 : index
      %12 = vector.load %arg7[%c0_10, %c0_11] : memref<128x128xf32, #tpu.memory_space<vmem>>, vector<128x128xf32>
      %c0_12 = arith.constant 0 : index
      %c0_13 = arith.constant 0 : index
      %13 = vector.load %arg4[%c0_12, %c0_13] : memref<1x128xf32, #tpu.memory_space<vmem>>, vector<1x128xf32>
      %14 = vector.broadcast %13 : vector<1x128xf32> to vector<128x128xf32>
      %15 = arith.mulf %12, %14 : vector<128x128xf32>
      %c0_14 = arith.constant 0 : index
      %c0_15 = arith.constant 0 : index
      %16 = vector.load %arg5[%c0_14, %c0_15] : memref<1x128xf32, #tpu.memory_space<vmem>>, vector<1x128xf32>
      %17 = vector.broadcast %16 : vector<1x128xf32> to vector<128x128xf32>
      %18 = arith.addf %15, %17 : vector<128x128xf32>
      %cst_16 = arith.constant 0.000000e+00 : f32
      %19 = vector.broadcast %cst_16 : f32 to vector<128x128xf32>
      %20 = arith.maximumf %18, %19 : vector<128x128xf32>
      %21 = arith.truncf %20 : vector<128x128xf32> to vector<128x128xbf16>
      %c0_17 = arith.constant 0 : index
      %c0_18 = arith.constant 0 : index
      %22 = vector.load %arg6[%c0_17, %c0_18] : memref<128x128xbf16, #tpu.memory_space<vmem>>, vector<128x128xbf16>
      tpu.vector_store %arg6[%c0_17, %c0_18], %21 {strides = array<i32>} : memref<128x128xbf16, #tpu.memory_space<vmem>>, vector<128x128xbf16>,
    } else {
    }
    return
  }
  func.func @transform_0(%arg0: i32, %arg1: i32) -> (i32, i32) {
    %c0_i32 = arith.constant 0 : i32
    return %arg0, %arg1 : i32, i32
  }
  func.func @transform_1(%arg0: i32, %arg1: i32) -> (i32, i32) {
    %c0_i32 = arith.constant 0 : i32
    %c0_i32_0 = arith.constant 0 : i32
    return %arg1, %c0_i32 : i32, i32
  }
  func.func @transform_2(%arg0: i32, %arg1: i32) -> (i32, i32) {
    %c0_i32 = arith.constant 0 : i32
    %c0_i32_0 = arith.constant 0 : i32
    %c0_i32_1 = arith.constant 0 : i32
    return %c0_i32, %c0_i32_0 : i32, i32
  }
  func.func @transform_3(%arg0: i32, %arg1: i32) -> (i32, i32) {
    %c0_i32 = arith.constant 0 : i32
    %c0_i32_0 = arith.constant 0 : i32
    %c0_i32_1 = arith.constant 0 : i32
    return %c0_i32, %c0_i32_0 : i32, i32
  }
  func.func @transform_4(%arg0: i32, %arg1: i32) -> (i32, i32) {
    %c0_i32 = arith.constant 0 : i32
    %c0_i32_0 = arith.constant 0 : i32
    return %arg0, %c0_i32 : i32, i32
  }
}

module attributes {stable_mosaic.version = 11 : i64} {
  func.func @_conv3x3_bn_relu_kernel(%arg0: i32, %arg1: memref<1x2x2x48x128xbf16, #tpu.memory_space<vmem>>, %arg2: memref<3x3x128x128xbf16, #tpu.memory_space<vmem>>, %arg3: memref<1x128xf32, #tpu.memory_space<vmem>>, %arg4: memref<1x128xf32, #tpu.memory_space<vmem>>, %arg5: memref<1x32x128xbf16, #tpu.memory_space<vmem>>) attributes {dimension_semantics = [#tpu.dimension_semantics<parallel>], iteration_bounds = array<i64: 2>, scalar_prefetch = 0 : i64, scratch_operands = 0 : i64, tpu.core_type = #tpu.core_type<tc>, window_params = [{transform_indices = @transform_0, window_bounds = array<i64: 1, 2, 2, 48, 128>}, {pipeline_mode = #tpu.pipeline_mode<synchronous>, transform_indices = @transform_1, window_bounds = array<i64: 3, 3, 128, 128>}, {pipeline_mode = #tpu.pipeline_mode<synchronous>, transform_indices = @transform_2, window_bounds = array<i64: 1, 128>}, {pipeline_mode = #tpu.pipeline_mode<synchronous>, transform_indices = @transform_3, window_bounds = array<i64: 1, 128>}, {transform_indices = @transform_4, window_bounds = array<i64: 1, 32, 128>}]} {
    %cst = arith.constant 0.000000e+00 : f32
    %0 = vector.broadcast %cst : f32 to vector<32x128xf32>
    %c0 = arith.constant 0 : index
    %c0_0 = arith.constant 0 : index
    %c0_1 = arith.constant 0 : index
    %c0_2 = arith.constant 0 : index
    %c0_3 = arith.constant 0 : index
    %1 = vector.load %arg1[%c0, %c0_0, %c0_1, %c0_2, %c0_3] : memref<1x2x2x48x128xbf16, #tpu.memory_space<vmem>>, vector<1x1x1x32x128xbf16>
    %2 = vector.shape_cast %1 : vector<1x1x1x32x128xbf16> to vector<32x128xbf16>
    %c0_4 = arith.constant 0 : index
    %c0_5 = arith.constant 0 : index
    %c0_6 = arith.constant 0 : index
    %c0_7 = arith.constant 0 : index
    %3 = vector.load %arg2[%c0_4, %c0_5, %c0_6, %c0_7] : memref<3x3x128x128xbf16, #tpu.memory_space<vmem>>, vector<1x1x128x128xbf16>
    %4 = vector.shape_cast %3 : vector<1x1x128x128xbf16> to vector<128x128xbf16>
    %cst_8 = arith.constant dense<0.000000e+00> : vector<32x128xf32>
    %5 = tpu.matmul %2, %4, %cst_8 {dimension_numbers = #tpu.dot_dimension_numbers<[1], [0], [0], [1], [0, 0, 1, 1], [], []>} : vector<32x128xbf16>, vector<128x128xbf16>, vector<32x128xf32> -> vector<32x128xf32>
    %6 = arith.addf %0, %5 : vector<32x128xf32>
    %c0_9 = arith.constant 0 : index
    %c0_10 = arith.constant 0 : index
    %c1 = arith.constant 1 : index
    %c0_11 = arith.constant 0 : index
    %c0_12 = arith.constant 0 : index
    %7 = vector.load %arg1[%c0_9, %c0_10, %c1, %c0_11, %c0_12] : memref<1x2x2x48x128xbf16, #tpu.memory_space<vmem>>, vector<1x1x1x32x128xbf16>
    %8 = vector.shape_cast %7 : vector<1x1x1x32x128xbf16> to vector<32x128xbf16>
    %c0_13 = arith.constant 0 : index
    %c1_14 = arith.constant 1 : index
    %c0_15 = arith.constant 0 : index
    %c0_16 = arith.constant 0 : index
    %9 = vector.load %arg2[%c0_13, %c1_14, %c0_15, %c0_16] : memref<3x3x128x128xbf16, #tpu.memory_space<vmem>>, vector<1x1x128x128xbf16>
    %10 = vector.shape_cast %9 : vector<1x1x128x128xbf16> to vector<128x128xbf16>
    %cst_17 = arith.constant dense<0.000000e+00> : vector<32x128xf32>
    %11 = tpu.matmul %8, %10, %cst_17 {dimension_numbers = #tpu.dot_dimension_numbers<[1], [0], [0], [1], [0, 0, 1, 1], [], []>} : vector<32x128xbf16>, vector<128x128xbf16>, vector<32x128xf32> -> vector<32x128xf32>
    %12 = arith.addf %6, %11 : vector<32x128xf32>
    %c0_18 = arith.constant 0 : index
    %c0_19 = arith.constant 0 : index
    %c0_20 = arith.constant 0 : index
    %c1_21 = arith.constant 1 : index
    %c0_22 = arith.constant 0 : index
    %13 = vector.load %arg1[%c0_18, %c0_19, %c0_20, %c1_21, %c0_22] : memref<1x2x2x48x128xbf16, #tpu.memory_space<vmem>>, vector<1x1x1x32x128xbf16>
    %14 = vector.shape_cast %13 : vector<1x1x1x32x128xbf16> to vector<32x128xbf16>
    %c0_23 = arith.constant 0 : index
    %c2 = arith.constant 2 : index
    %c0_24 = arith.constant 0 : index
    %c0_25 = arith.constant 0 : index
    %15 = vector.load %arg2[%c0_23, %c2, %c0_24, %c0_25] : memref<3x3x128x128xbf16, #tpu.memory_space<vmem>>, vector<1x1x128x128xbf16>
    %16 = vector.shape_cast %15 : vector<1x1x128x128xbf16> to vector<128x128xbf16>
    %cst_26 = arith.constant dense<0.000000e+00> : vector<32x128xf32>
    %17 = tpu.matmul %14, %16, %cst_26 {dimension_numbers = #tpu.dot_dimension_numbers<[1], [0], [0], [1], [0, 0, 1, 1], [], []>} : vector<32x128xbf16>, vector<128x128xbf16>, vector<32x128xf32> -> vector<32x128xf32>
    %18 = arith.addf %12, %17 : vector<32x128xf32>
    %c0_27 = arith.constant 0 : index
    %c1_28 = arith.constant 1 : index
    %c0_29 = arith.constant 0 : index
    %c0_30 = arith.constant 0 : index
    %c0_31 = arith.constant 0 : index
    %19 = vector.load %arg1[%c0_27, %c1_28, %c0_29, %c0_30, %c0_31] : memref<1x2x2x48x128xbf16, #tpu.memory_space<vmem>>, vector<1x1x1x32x128xbf16>
    %20 = vector.shape_cast %19 : vector<1x1x1x32x128xbf16> to vector<32x128xbf16>
    %c1_32 = arith.constant 1 : index
    %c0_33 = arith.constant 0 : index
    %c0_34 = arith.constant 0 : index
    %c0_35 = arith.constant 0 : index
    %21 = vector.load %arg2[%c1_32, %c0_33, %c0_34, %c0_35] : memref<3x3x128x128xbf16, #tpu.memory_space<vmem>>, vector<1x1x128x128xbf16>
    %22 = vector.shape_cast %21 : vector<1x1x128x128xbf16> to vector<128x128xbf16>
    %cst_36 = arith.constant dense<0.000000e+00> : vector<32x128xf32>
    %23 = tpu.matmul %20, %22, %cst_36 {dimension_numbers = #tpu.dot_dimension_numbers<[1], [0], [0], [1], [0, 0, 1, 1], [], []>} : vector<32x128xbf16>, vector<128x128xbf16>, vector<32x128xf32> -> vector<32x128xf32>
    %24 = arith.addf %18, %23 : vector<32x128xf32>
    %c0_37 = arith.constant 0 : index
    %c1_38 = arith.constant 1 : index
    %c1_39 = arith.constant 1 : index
    %c0_40 = arith.constant 0 : index
    %c0_41 = arith.constant 0 : index
    %25 = vector.load %arg1[%c0_37, %c1_38, %c1_39, %c0_40, %c0_41] : memref<1x2x2x48x128xbf16, #tpu.memory_space<vmem>>, vector<1x1x1x32x128xbf16>
    %26 = vector.shape_cast %25 : vector<1x1x1x32x128xbf16> to vector<32x128xbf16>
    %c1_42 = arith.constant 1 : index
    %c1_43 = arith.constant 1 : index
    %c0_44 = arith.constant 0 : index
    %c0_45 = arith.constant 0 : index
    %27 = vector.load %arg2[%c1_42, %c1_43, %c0_44, %c0_45] : memref<3x3x128x128xbf16, #tpu.memory_space<vmem>>, vector<1x1x128x128xbf16>
    %28 = vector.shape_cast %27 : vector<1x1x128x128xbf16> to vector<128x128xbf16>
    %cst_46 = arith.constant dense<0.000000e+00> : vector<32x128xf32>
    %29 = tpu.matmul %26, %28, %cst_46 {dimension_numbers = #tpu.dot_dimension_numbers<[1], [0], [0], [1], [0, 0, 1, 1], [], []>} : vector<32x128xbf16>, vector<128x128xbf16>, vector<32x128xf32> -> vector<32x128xf32>
    %30 = arith.addf %24, %29 : vector<32x128xf32>
    %c0_47 = arith.constant 0 : index
    %c1_48 = arith.constant 1 : index
    %c0_49 = arith.constant 0 : index
    %c1_50 = arith.constant 1 : index
    %c0_51 = arith.constant 0 : index
    %31 = vector.load %arg1[%c0_47, %c1_48, %c0_49, %c1_50, %c0_51] : memref<1x2x2x48x128xbf16, #tpu.memory_space<vmem>>, vector<1x1x1x32x128xbf16>
    %32 = vector.shape_cast %31 : vector<1x1x1x32x128xbf16> to vector<32x128xbf16>
    %c1_52 = arith.constant 1 : index
    %c2_53 = arith.constant 2 : index
    %c0_54 = arith.constant 0 : index
    %c0_55 = arith.constant 0 : index
    %33 = vector.load %arg2[%c1_52, %c2_53, %c0_54, %c0_55] : memref<3x3x128x128xbf16, #tpu.memory_space<vmem>>, vector<1x1x128x128xbf16>
    %34 = vector.shape_cast %33 : vector<1x1x128x128xbf16> to vector<128x128xbf16>
    %cst_56 = arith.constant dense<0.000000e+00> : vector<32x128xf32>
    %35 = tpu.matmul %32, %34, %cst_56 {dimension_numbers = #tpu.dot_dimension_numbers<[1], [0], [0], [1], [0, 0, 1, 1], [], []>} : vector<32x128xbf16>, vector<128x128xbf16>, vector<32x128xf32> -> vector<32x128xf32>
    %36 = arith.addf %30, %35 : vector<32x128xf32>
    %c0_57 = arith.constant 0 : index
    %c0_58 = arith.constant 0 : index
    %c0_59 = arith.constant 0 : index
    %c8 = arith.constant 8 : index
    %c0_60 = arith.constant 0 : index
    %37 = vector.load %arg1[%c0_57, %c0_58, %c0_59, %c8, %c0_60] : memref<1x2x2x48x128xbf16, #tpu.memory_space<vmem>>, vector<1x1x1x32x128xbf16>
    %38 = vector.shape_cast %37 : vector<1x1x1x32x128xbf16> to vector<32x128xbf16>
    %c2_61 = arith.constant 2 : index
    %c0_62 = arith.constant 0 : index
    %c0_63 = arith.constant 0 : index
    %c0_64 = arith.constant 0 : index
    %39 = vector.load %arg2[%c2_61, %c0_62, %c0_63, %c0_64] : memref<3x3x128x128xbf16, #tpu.memory_space<vmem>>, vector<1x1x128x128xbf16>
    %40 = vector.shape_cast %39 : vector<1x1x128x128xbf16> to vector<128x128xbf16>
    %cst_65 = arith.constant dense<0.000000e+00> : vector<32x128xf32>
    %41 = tpu.matmul %38, %40, %cst_65 {dimension_numbers = #tpu.dot_dimension_numbers<[1], [0], [0], [1], [0, 0, 1, 1], [], []>} : vector<32x128xbf16>, vector<128x128xbf16>, vector<32x128xf32> -> vector<32x128xf32>
    %42 = arith.addf %36, %41 : vector<32x128xf32>
    %c0_66 = arith.constant 0 : index
    %c0_67 = arith.constant 0 : index
    %c1_68 = arith.constant 1 : index
    %c8_69 = arith.constant 8 : index
    %c0_70 = arith.constant 0 : index
    %43 = vector.load %arg1[%c0_66, %c0_67, %c1_68, %c8_69, %c0_70] : memref<1x2x2x48x128xbf16, #tpu.memory_space<vmem>>, vector<1x1x1x32x128xbf16>
    %44 = vector.shape_cast %43 : vector<1x1x1x32x128xbf16> to vector<32x128xbf16>
    %c2_71 = arith.constant 2 : index
    %c1_72 = arith.constant 1 : index
    %c0_73 = arith.constant 0 : index
    %c0_74 = arith.constant 0 : index
    %45 = vector.load %arg2[%c2_71, %c1_72, %c0_73, %c0_74] : memref<3x3x128x128xbf16, #tpu.memory_space<vmem>>, vector<1x1x128x128xbf16>
    %46 = vector.shape_cast %45 : vector<1x1x128x128xbf16> to vector<128x128xbf16>
    %cst_75 = arith.constant dense<0.000000e+00> : vector<32x128xf32>
    %47 = tpu.matmul %44, %46, %cst_75 {dimension_numbers = #tpu.dot_dimension_numbers<[1], [0], [0], [1], [0, 0, 1, 1], [], []>} : vector<32x128xbf16>, vector<128x128xbf16>, vector<32x128xf32> -> vector<32x128xf32>
    %48 = arith.addf %42, %47 : vector<32x128xf32>
    %c0_76 = arith.constant 0 : index
    %c0_77 = arith.constant 0 : index
    %c0_78 = arith.constant 0 : index
    %c9 = arith.constant 9 : index
    %c0_79 = arith.constant 0 : index
    %49 = vector.load %arg1[%c0_76, %c0_77, %c0_78, %c9, %c0_79] : memref<1x2x2x48x128xbf16, #tpu.memory_space<vmem>>, vector<1x1x1x32x128xbf16>
    %50 = vector.shape_cast %49 : vector<1x1x1x32x128xbf16> to vector<32x128xbf16>
    %c2_80 = arith.constant 2 : index
    %c2_81 = arith.constant 2 : index
    %c0_82 = arith.constant 0 : index
    %c0_83 = arith.constant 0 : index
    %51 = vector.load %arg2[%c2_80, %c2_81, %c0_82, %c0_83] : memref<3x3x128x128xbf16, #tpu.memory_space<vmem>>, vector<1x1x128x128xbf16>
    %52 = vector.shape_cast %51 : vector<1x1x128x128xbf16> to vector<128x128xbf16>
    %cst_84 = arith.constant dense<0.000000e+00> : vector<32x128xf32>
    %53 = tpu.matmul %50, %52, %cst_84 {dimension_numbers = #tpu.dot_dimension_numbers<[1], [0], [0], [1], [0, 0, 1, 1], [], []>} : vector<32x128xbf16>, vector<128x128xbf16>, vector<32x128xf32> -> vector<32x128xf32>
    %54 = arith.addf %48, %53 : vector<32x128xf32>
    %c0_85 = arith.constant 0 : index
    %c0_86 = arith.constant 0 : index
    %55 = vector.load %arg3[%c0_85, %c0_86] : memref<1x128xf32, #tpu.memory_space<vmem>>, vector<1x128xf32>
    %56 = vector.broadcast %55 : vector<1x128xf32> to vector<32x128xf32>
    %57 = arith.mulf %54, %56 : vector<32x128xf32>
    %c0_87 = arith.constant 0 : index
    %c0_88 = arith.constant 0 : index
    %58 = vector.load %arg4[%c0_87, %c0_88] : memref<1x128xf32, #tpu.memory_space<vmem>>, vector<1x128xf32>
    %59 = vector.broadcast %58 : vector<1x128xf32> to vector<32x128xf32>
    %60 = arith.addf %57, %59 : vector<32x128xf32>
    %cst_89 = arith.constant 0.000000e+00 : f32
    %61 = vector.broadcast %cst_89 : f32 to vector<32x128xf32>
    %62 = arith.maximumf %60, %61 : vector<32x128xf32>
    %63 = arith.truncf %62 : vector<32x128xf32> to vector<32x128xbf16>
    %c0_90 = arith.constant 0 : index
    %c0_91 = arith.constant 0 : index
    %c0_92 = arith.constant 0 : index
    %64 = vector.load %arg5[%c0_90, %c0_91, %c0_92] : memref<1x32x128xbf16, #tpu.memory_space<vmem>>, vector<1x32x128xbf16>
    %65 = vector.shape_cast %64 : vector<1x32x128xbf16> to vector<32x128xbf16>
    %66 = vector.shape_cast %63 : vector<32x128xbf16> to vector<1x32x128xbf16>
    tpu.vector_store %arg5[%c0_90, %c0_91, %c0_92], %66 {strides = array<i32>} : memref<1x32x128xbf16, #tpu.memory_space<vmem>>, vector<1x32x128xbf16>,
    return
  }
  func.func @transform_0(%arg0: i32) -> (i32, i32, i32, i32, i32) {
    %c0_i32 = arith.constant 0 : i32
    %c0_i32_0 = arith.constant 0 : i32
    %c0_i32_1 = arith.constant 0 : i32
    %c0_i32_2 = arith.constant 0 : i32
    %c0_i32_3 = arith.constant 0 : i32
    return %arg0, %c0_i32, %c0_i32_0, %c0_i32_1, %c0_i32_2 : i32, i32, i32, i32, i32
  }
  func.func @transform_1(%arg0: i32) -> (i32, i32, i32, i32) {
    %c0_i32 = arith.constant 0 : i32
    %c0_i32_0 = arith.constant 0 : i32
    %c0_i32_1 = arith.constant 0 : i32
    %c0_i32_2 = arith.constant 0 : i32
    %c0_i32_3 = arith.constant 0 : i32
    return %c0_i32, %c0_i32_0, %c0_i32_1, %c0_i32_2 : i32, i32, i32, i32
  }
  func.func @transform_2(%arg0: i32) -> (i32, i32) {
    %c0_i32 = arith.constant 0 : i32
    %c0_i32_0 = arith.constant 0 : i32
    %c0_i32_1 = arith.constant 0 : i32
    return %c0_i32, %c0_i32_0 : i32, i32
  }
  func.func @transform_3(%arg0: i32) -> (i32, i32) {
    %c0_i32 = arith.constant 0 : i32
    %c0_i32_0 = arith.constant 0 : i32
    %c0_i32_1 = arith.constant 0 : i32
    return %c0_i32, %c0_i32_0 : i32, i32
  }
  func.func @transform_4(%arg0: i32) -> (i32, i32, i32) {
    %c0_i32 = arith.constant 0 : i32
    %c0_i32_0 = arith.constant 0 : i32
    %c0_i32_1 = arith.constant 0 : i32
    return %arg0, %c0_i32, %c0_i32_0 : i32, i32, i32
  }
}

module attributes {stable_mosaic.version = 11 : i64} {
  func.func @_conv3_sc_res_kernel(%arg0: i32, %arg1: memref<32x128xbf16, #tpu.memory_space<vmem>>, %arg2: memref<128x128xbf16, #tpu.memory_space<vmem>>, %arg3: memref<1x128xf32, #tpu.memory_space<vmem>>, %arg4: memref<1x128xf32, #tpu.memory_space<vmem>>, %arg5: memref<32x128xbf16, #tpu.memory_space<vmem>>, %arg6: memref<128x128xbf16, #tpu.memory_space<vmem>>, %arg7: memref<1x128xf32, #tpu.memory_space<vmem>>, %arg8: memref<1x128xf32, #tpu.memory_space<vmem>>, %arg9: memref<32x128xf32, #tpu.memory_space<vmem>>, %arg10: memref<32x128xf32, #tpu.memory_space<vmem>>) attributes {dimension_semantics = [#tpu.dimension_semantics<parallel>], iteration_bounds = array<i64: 1>, scalar_prefetch = 0 : i64, scratch_operands = 0 : i64, tpu.core_type = #tpu.core_type<tc>, window_params = [{transform_indices = @transform_0, window_bounds = array<i64: 32, 128>}, {pipeline_mode = #tpu.pipeline_mode<synchronous>, transform_indices = @transform_1, window_bounds = array<i64: 128, 128>}, {pipeline_mode = #tpu.pipeline_mode<synchronous>, transform_indices = @transform_2, window_bounds = array<i64: 1, 128>}, {pipeline_mode = #tpu.pipeline_mode<synchronous>, transform_indices = @transform_3, window_bounds = array<i64: 1, 128>}, {transform_indices = @transform_4, window_bounds = array<i64: 32, 128>}, {pipeline_mode = #tpu.pipeline_mode<synchronous>, transform_indices = @transform_5, window_bounds = array<i64: 128, 128>}, {pipeline_mode = #tpu.pipeline_mode<synchronous>, transform_indices = @transform_6, window_bounds = array<i64: 1, 128>}, {pipeline_mode = #tpu.pipeline_mode<synchronous>, transform_indices = @transform_7, window_bounds = array<i64: 1, 128>}, {transform_indices = @transform_8, window_bounds = array<i64: 32, 128>}, {transform_indices = @transform_9, window_bounds = array<i64: 32, 128>}]} {
    %c0 = arith.constant 0 : index
    %c0_0 = arith.constant 0 : index
    %0 = vector.load %arg1[%c0, %c0_0] : memref<32x128xbf16, #tpu.memory_space<vmem>>, vector<32x128xbf16>
    %c0_1 = arith.constant 0 : index
    %c0_2 = arith.constant 0 : index
    %1 = vector.load %arg2[%c0_1, %c0_2] : memref<128x128xbf16, #tpu.memory_space<vmem>>, vector<128x128xbf16>
    %cst = arith.constant dense<0.000000e+00> : vector<32x128xf32>
    %2 = tpu.matmul %0, %1, %cst {dimension_numbers = #tpu.dot_dimension_numbers<[1], [0], [0], [1], [0, 0, 1, 1], [], []>} : vector<32x128xbf16>, vector<128x128xbf16>, vector<32x128xf32> -> vector<32x128xf32>
    %c0_3 = arith.constant 0 : index
    %c0_4 = arith.constant 0 : index
    %3 = vector.load %arg3[%c0_3, %c0_4] : memref<1x128xf32, #tpu.memory_space<vmem>>, vector<1x128xf32>
    %4 = vector.broadcast %3 : vector<1x128xf32> to vector<32x128xf32>
    %5 = arith.mulf %2, %4 : vector<32x128xf32>
    %c0_5 = arith.constant 0 : index
    %c0_6 = arith.constant 0 : index
    %6 = vector.load %arg4[%c0_5, %c0_6] : memref<1x128xf32, #tpu.memory_space<vmem>>, vector<1x128xf32>
    %7 = vector.broadcast %6 : vector<1x128xf32> to vector<32x128xf32>
    %8 = arith.addf %5, %7 : vector<32x128xf32>
    %c0_7 = arith.constant 0 : index
    %c0_8 = arith.constant 0 : index
    %9 = vector.load %arg5[%c0_7, %c0_8] : memref<32x128xbf16, #tpu.memory_space<vmem>>, vector<32x128xbf16>
    %c0_9 = arith.constant 0 : index
    %c0_10 = arith.constant 0 : index
    %10 = vector.load %arg6[%c0_9, %c0_10] : memref<128x128xbf16, #tpu.memory_space<vmem>>, vector<128x128xbf16>
    %cst_11 = arith.constant dense<0.000000e+00> : vector<32x128xf32>
    %11 = tpu.matmul %9, %10, %cst_11 {dimension_numbers = #tpu.dot_dimension_numbers<[1], [0], [0], [1], [0, 0, 1, 1], [], []>} : vector<32x128xbf16>, vector<128x128xbf16>, vector<32x128xf32> -> vector<32x128xf32>
    %c0_12 = arith.constant 0 : index
    %c0_13 = arith.constant 0 : index
    %12 = vector.load %arg7[%c0_12, %c0_13] : memref<1x128xf32, #tpu.memory_space<vmem>>, vector<1x128xf32>
    %13 = vector.broadcast %12 : vector<1x128xf32> to vector<32x128xf32>
    %14 = arith.mulf %11, %13 : vector<32x128xf32>
    %15 = arith.addf %8, %14 : vector<32x128xf32>
    %c0_14 = arith.constant 0 : index
    %c0_15 = arith.constant 0 : index
    %16 = vector.load %arg8[%c0_14, %c0_15] : memref<1x128xf32, #tpu.memory_space<vmem>>, vector<1x128xf32>
    %17 = vector.broadcast %16 : vector<1x128xf32> to vector<32x128xf32>
    %18 = arith.addf %15, %17 : vector<32x128xf32>
    %c0_16 = arith.constant 0 : index
    %c0_17 = arith.constant 0 : index
    %19 = vector.load %arg10[%c0_16, %c0_17] : memref<32x128xf32, #tpu.memory_space<vmem>>, vector<32x128xf32>
    tpu.vector_store %arg10[%c0_16, %c0_17], %18 {strides = array<i32>} : memref<32x128xf32, #tpu.memory_space<vmem>>, vector<32x128xf32>,
    %cst_18 = arith.constant 0.000000e+00 : f32
    %20 = vector.broadcast %cst_18 : f32 to vector<32x128xf32>
    %21 = arith.maximumf %18, %20 : vector<32x128xf32>
    %c0_19 = arith.constant 0 : index
    %c0_20 = arith.constant 0 : index
    %22 = vector.load %arg9[%c0_19, %c0_20] : memref<32x128xf32, #tpu.memory_space<vmem>>, vector<32x128xf32>
    tpu.vector_store %arg9[%c0_19, %c0_20], %21 {strides = array<i32>} : memref<32x128xf32, #tpu.memory_space<vmem>>, vector<32x128xf32>,
    return
  }
  func.func @transform_0(%arg0: i32) -> (i32, i32) {
    %c0_i32 = arith.constant 0 : i32
    %c0_i32_0 = arith.constant 0 : i32
    return %arg0, %c0_i32 : i32, i32
  }
  func.func @transform_1(%arg0: i32) -> (i32, i32) {
    %c0_i32 = arith.constant 0 : i32
    %c0_i32_0 = arith.constant 0 : i32
    %c0_i32_1 = arith.constant 0 : i32
    return %c0_i32, %c0_i32_0 : i32, i32
  }
  func.func @transform_2(%arg0: i32) -> (i32, i32) {
    %c0_i32 = arith.constant 0 : i32
    %c0_i32_0 = arith.constant 0 : i32
    %c0_i32_1 = arith.constant 0 : i32
    return %c0_i32, %c0_i32_0 : i32, i32
  }
  func.func @transform_3(%arg0: i32) -> (i32, i32) {
    %c0_i32 = arith.constant 0 : i32
    %c0_i32_0 = arith.constant 0 : i32
    %c0_i32_1 = arith.constant 0 : i32
    return %c0_i32, %c0_i32_0 : i32, i32
  }
  func.func @transform_4(%arg0: i32) -> (i32, i32) {
    %c0_i32 = arith.constant 0 : i32
    %c0_i32_0 = arith.constant 0 : i32
    return %arg0, %c0_i32 : i32, i32
  }
  func.func @transform_5(%arg0: i32) -> (i32, i32) {
    %c0_i32 = arith.constant 0 : i32
    %c0_i32_0 = arith.constant 0 : i32
    %c0_i32_1 = arith.constant 0 : i32
    return %c0_i32, %c0_i32_0 : i32, i32
  }
  func.func @transform_6(%arg0: i32) -> (i32, i32) {
    %c0_i32 = arith.constant 0 : i32
    %c0_i32_0 = arith.constant 0 : i32
    %c0_i32_1 = arith.constant 0 : i32
    return %c0_i32, %c0_i32_0 : i32, i32
  }
  func.func @transform_7(%arg0: i32) -> (i32, i32) {
    %c0_i32 = arith.constant 0 : i32
    %c0_i32_0 = arith.constant 0 : i32
    %c0_i32_1 = arith.constant 0 : i32
    return %c0_i32, %c0_i32_0 : i32, i32
  }
  func.func @transform_8(%arg0: i32) -> (i32, i32) {
    %c0_i32 = arith.constant 0 : i32
    %c0_i32_0 = arith.constant 0 : i32
    return %arg0, %c0_i32 : i32, i32
  }
  func.func @transform_9(%arg0: i32) -> (i32, i32) {
    %c0_i32 = arith.constant 0 : i32
    %c0_i32_0 = arith.constant 0 : i32
    return %arg0, %c0_i32 : i32, i32
  }
}

</mosaic_0001>

<llo_original>
// kernel: _bottleneck_forward.3
$region0: #{_bottleneck_forward.3}
  #allocation0 [shape = 'u32[]', space=smem, size = 0x4, offset = 0x4, fixed_abs, tag = 'smem constant byte address 0x4 - core index']
  #allocation1 [shape = 'u32[72,128]{1,0:T(1,128)}', space=vmem, size = 0x9000, scoped, tag = 'internal scratch']
  #allocation2 [shape = 'f32[128,128]{1,0:T(8,128)}', space=vmem, size = 0x10000, scoped, tag = 'scratch operand']
  %s0 = inlined_call_operand.vmem [shape: bf16[128,128], index: 0, kind: input, shape index: {}]
  %s1 = inlined_call_operand.vmem [shape: bf16[128,128], index: 1, kind: input, shape index: {}]
  %s2 = inlined_call_operand.vmem [shape: f32[1,128], index: 2, kind: input, shape index: {}]
  %s3 = inlined_call_operand.vmem [shape: f32[1,128], index: 3, kind: input, shape index: {}]
  %s4 = inlined_call_operand.vmem [shape: bf16[128,128], index: 4, kind: output, shape index: {}]
  %s5 = sld [smem:[#allocation0]]
  $region34: #{_bottleneck_forward.3} parent=0
    _
  %s7 = ssub.s32 1, %s5
  %s8 = scalar_select 0, %s7, %s5
  // Predicated region
  $region2: #{_bottleneck_forward.3} parent=0 // pred_check
    _
  $region3: #{_bottleneck_forward.3} parent=0 // pred_check_branch
    %10 = sbr.rel (0) target = $region5
  $region4: #{_bottleneck_forward.3} parent=0 // pred_region
    _
  $region5: #{_bottleneck_forward.3} parent=0 // pred_fallthru
    _
  // Predicated region
  $region6: #{_bottleneck_forward.3} parent=0 // pred_check
    _
  $region7: #{_bottleneck_forward.3} parent=0 // pred_check_branch
    %12 = sbr.rel (0) target = $region9
  $region8: #{_bottleneck_forward.3} parent=0 // pred_region
    _
  $region9: #{_bottleneck_forward.3} parent=0 // pred_fallthru
    _
  // Predicated region
  $region10: #{_bottleneck_forward.3} parent=0 // pred_check
    _
  $region11: #{_bottleneck_forward.3} parent=0 // pred_check_branch
    %14 = sbr.rel (0) target = $region13
  $region12: #{_bottleneck_forward.3} parent=0 // pred_region
    _
  $region13: #{_bottleneck_forward.3} parent=0 // pred_fallthru
    _
  // Predicated region
  $region14: #{_bottleneck_forward.3} parent=0 // pred_check
    _
  $region15: #{_bottleneck_forward.3} parent=0 // pred_check_branch
    %16 = sbr.rel (0) target = $region17
  $region16: #{_bottleneck_forward.3} parent=0 // pred_region
    _
  $region17: #{_bottleneck_forward.3} parent=0 // pred_fallthru
    _
  %p17 = scmp.eq.s32.totalorder 0, 0
  // Predicated region
  $region18: #{_bottleneck_forward.3} parent=0 // pred_check
    %p18 = pneg %p17
  $region19: #{_bottleneck_forward.3} parent=0 // pred_check_branch
    %20 = sbr.rel (%p18) target = $region21
  $region20: #{_bottleneck_forward.3} parent=0 // pred_region
    %21 = vst [vmem:[#allocation2] sm:$0xff] 0.0
    %22 = vst [vmem:[#allocation2 + $0x8] sm:$0xff] 0.0
    %23 = vst [vmem:[#allocation2 + $0x10] sm:$0xff] 0.0
    %24 = vst [vmem:[#allocation2 + $0x18] sm:$0xff] 0.0
    %25 = vst [vmem:[#allocation2 + $0x20] sm:$0xff] 0.0
    %26 = vst [vmem:[#allocation2 + $0x28] sm:$0xff] 0.0
    %27 = vst [vmem:[#allocation2 + $0x30] sm:$0xff] 0.0
    %28 = vst [vmem:[#allocation2 + $0x38] sm:$0xff] 0.0
    %29 = vst [vmem:[#allocation2 + $0x40] sm:$0xff] 0.0
    %30 = vst [vmem:[#allocation2 + $0x48] sm:$0xff] 0.0
    %31 = vst [vmem:[#allocation2 + $0x50] sm:$0xff] 0.0
    %32 = vst [vmem:[#allocation2 + $0x58] sm:$0xff] 0.0
    %33 = vst [vmem:[#allocation2 + $0x60] sm:$0xff] 0.0
    %34 = vst [vmem:[#allocation2 + $0x68] sm:$0xff] 0.0
    %35 = vst [vmem:[#allocation2 + $0x70] sm:$0xff] 0.0
    %36 = vst [vmem:[#allocation2 + $0x78] sm:$0xff] 0.0
  $region21: #{_bottleneck_forward.3} parent=0 // pred_fallthru
    _
  %v37 = vld [vmem:[#allocation2] sm:$0xff]
  %v38 = vld [vmem:[#allocation2 + $0x8] sm:$0xff]
  %v39 = vld [vmem:[#allocation2 + $0x10] sm:$0xff]
  %v40 = vld [vmem:[#allocation2 + $0x18] sm:$0xff]
  %v41 = vld [vmem:[#allocation2 + $0x20] sm:$0xff]
  %v42 = vld [vmem:[#allocation2 + $0x28] sm:$0xff]
  %v43 = vld [vmem:[#allocation2 + $0x30] sm:$0xff]
  %v44 = vld [vmem:[#allocation2 + $0x38] sm:$0xff]
  %v45 = vld [vmem:[#allocation2 + $0x40] sm:$0xff]
  %v46 = vld [vmem:[#allocation2 + $0x48] sm:$0xff]
  %v47 = vld [vmem:[#allocation2 + $0x50] sm:$0xff]
  %v48 = vld [vmem:[#allocation2 + $0x58] sm:$0xff]
  %v49 = vld [vmem:[#allocation2 + $0x60] sm:$0xff]
  %v50 = vld [vmem:[#allocation2 + $0x68] sm:$0xff]
  %v51 = vld [vmem:[#allocation2 + $0x70] sm:$0xff]
  %v52 = vld [vmem:[#allocation2 + $0x78] sm:$0xff]
  %v53 = vld [vmem:[%s0] sm:$0xf]
  %v54 = vld [vmem:[%s0 + $0x4] sm:$0xf]
  %v55 = vld [vmem:[%s0 + $0x8] sm:$0xf]
  %v56 = vld [vmem:[%s0 + $0xc] sm:$0xf]
  %v57 = vld [vmem:[%s0 + $0x10] sm:$0xf]
  %v58 = vld [vmem:[%s0 + $0x14] sm:$0xf]
  %v59 = vld [vmem:[%s0 + $0x18] sm:$0xf]
  %v60 = vld [vmem:[%s0 + $0x1c] sm:$0xf]
  %v61 = vld [vmem:[%s0 + $0x20] sm:$0xf]
  %v62 = vld [vmem:[%s0 + $0x24] sm:$0xf]
  %v63 = vld [vmem:[%s0 + $0x28] sm:$0xf]
  %v64 = vld [vmem:[%s0 + $0x2c] sm:$0xf]
  %v65 = vld [vmem:[%s0 + $0x30] sm:$0xf]
  %v66 = vld [vmem:[%s0 + $0x34] sm:$0xf]
  %v67 = vld [vmem:[%s0 + $0x38] sm:$0xf]
  %v68 = vld [vmem:[%s0 + $0x3c] sm:$0xf]
  %v69 = vld [vmem:[%s1] sm:$0xf]
  %v70 = vld [vmem:[%s1 + $0x4] sm:$0xf]
  %v71 = vld [vmem:[%s1 + $0x8] sm:$0xf]
  %v72 = vld [vmem:[%s1 + $0xc] sm:$0xf]
  %v73 = vld [vmem:[%s1 + $0x10] sm:$0xf]
  %v74 = vld [vmem:[%s1 + $0x14] sm:$0xf]
  %v75 = vld [vmem:[%s1 + $0x18] sm:$0xf]
  %v76 = vld [vmem:[%s1 + $0x1c] sm:$0xf]
  %v77 = vld [vmem:[%s1 + $0x20] sm:$0xf]
  %v78 = vld [vmem:[%s1 + $0x24] sm:$0xf]
  %v79 = vld [vmem:[%s1 + $0x28] sm:$0xf]
  %v80 = vld [vmem:[%s1 + $0x2c] sm:$0xf]
  %v81 = vld [vmem:[%s1 + $0x30] sm:$0xf]
  %v82 = vld [vmem:[%s1 + $0x34] sm:$0xf]
  %v83 = vld [vmem:[%s1 + $0x38] sm:$0xf]
  %v84 = vld [vmem:[%s1 + $0x3c] sm:$0xf]
  %v101 = vunpack.c.l.b16 %v53
  %v102 = vunpack.c.l.b16 %v54
  %v103 = vunpack.c.l.b16 %v55
  %v104 = vunpack.c.l.b16 %v56
  %v105 = vunpack.c.l.b16 %v57
  %v106 = vunpack.c.l.b16 %v58
  %v107 = vunpack.c.l.b16 %v59
  %v108 = vunpack.c.l.b16 %v60
  %v109 = vunpack.c.l.b16 %v61
  %v110 = vunpack.c.l.b16 %v62
  %v111 = vunpack.c.l.b16 %v63
  %v112 = vunpack.c.l.b16 %v64
  %v113 = vunpack.c.l.b16 %v65
  %v114 = vunpack.c.l.b16 %v66
  %v115 = vunpack.c.l.b16 %v67
  %v116 = vunpack.c.l.b16 %v68
  %v117 = vpack.c.b16 %v102, %v101
  %v118 = vpack.c.b16 %v104, %v103
  %v119 = vpack.c.b16 %v106, %v105
  %v120 = vpack.c.b16 %v108, %v107
  %v121 = vpack.c.b16 %v110, %v109
  %v122 = vpack.c.b16 %v112, %v111
  %v123 = vpack.c.b16 %v114, %v113
  %v124 = vpack.c.b16 %v116, %v115
  %v149 = vunpack.c.l.b16 %v69
  %v150 = vunpack.c.l.b16 %v70
  %v151 = vunpack.c.l.b16 %v71
  %v152 = vunpack.c.l.b16 %v72
  %v153 = vunpack.c.l.b16 %v73
  %v154 = vunpack.c.l.b16 %v74
  %v155 = vunpack.c.l.b16 %v75
  %v156 = vunpack.c.l.b16 %v76
  %v157 = vunpack.c.l.b16 %v77
  %v158 = vunpack.c.l.b16 %v78
  %v159 = vunpack.c.l.b16 %v79
  %v160 = vunpack.c.l.b16 %v80
  %v161 = vunpack.c.l.b16 %v81
  %v162 = vunpack.c.l.b16 %v82
  %v163 = vunpack.c.l.b16 %v83
  %v164 = vunpack.c.l.b16 %v84
  %v165 = vpack.c.b16 %v150, %v149
  %v166 = vpack.c.b16 %v152, %v151
  %v167 = vpack.c.b16 %v154, %v153
  %v168 = vpack.c.b16 %v156, %v155
  %v169 = vpack.c.b16 %v158, %v157
  %v170 = vpack.c.b16 %v160, %v159
  %v171 = vpack.c.b16 %v162, %v161
  %v172 = vpack.c.b16 %v164, %v163
  %181 = vmatpush.bf16.msra.mxu0 %v172
  %182 = vmatpush.bf16.msra.mxu0 %v171
  %183 = vmatpush.bf16.msra.mxu0 %v170
  %184 = vmatpush.bf16.msra.mxu0 %v169
  %185 = vmatpush.bf16.msra.mxu0 %v168
  %186 = vmatpush.bf16.msra.mxu0 %v167
  %187 = vmatpush.bf16.msra.mxu0 %v166
  %188 = vmatpush.bf16.msra.mxu0 %v165
  %189 = vmatmul.bf16.gmra.mxu0 %v117
  %v190 = vpop.f32.mrf.mxu0
  %v191 = vadd.f32 0.0, %v190
  %v192 = vpop.f32.mrf.mxu0
  %v193 = vadd.f32 0.0, %v192
  %194 = vmatmul.bf16.gmra.mxu0 %v118
  %v195 = vpop.f32.mrf.mxu0
  %v196 = vadd.f32 0.0, %v195
  %v197 = vpop.f32.mrf.mxu0
  %v198 = vadd.f32 0.0, %v197
  %199 = vmatmul.bf16.gmra.mxu0 %v119
  %v200 = vpop.f32.mrf.mxu0
  %v201 = vadd.f32 0.0, %v200
  %v202 = vpop.f32.mrf.mxu0
  %v203 = vadd.f32 0.0, %v202
  %204 = vmatmul.bf16.gmra.mxu0 %v120
  %v205 = vpop.f32.mrf.mxu0
  %v206 = vadd.f32 0.0, %v205
  %v207 = vpop.f32.mrf.mxu0
  %v208 = vadd.f32 0.0, %v207
  %209 = vmatmul.bf16.gmra.mxu0 %v121
  %v210 = vpop.f32.mrf.mxu0
  %v211 = vadd.f32 0.0, %v210
  %v212 = vpop.f32.mrf.mxu0
  %v213 = vadd.f32 0.0, %v212
  %214 = vmatmul.bf16.gmra.mxu0 %v122
  %v215 = vpop.f32.mrf.mxu0
  %v216 = vadd.f32 0.0, %v215
  %v217 = vpop.f32.mrf.mxu0
  %v218 = vadd.f32 0.0, %v217
  %219 = vmatmul.bf16.gmra.mxu0 %v123
  %v220 = vpop.f32.mrf.mxu0
  %v221 = vadd.f32 0.0, %v220
  %v222 = vpop.f32.mrf.mxu0
  %v223 = vadd.f32 0.0, %v222
  %224 = vmatmul.bf16.gmra.mxu0 %v124
  %v225 = vpop.f32.mrf.mxu0
  %v226 = vadd.f32 0.0, %v225
  %v227 = vpop.f32.mrf.mxu0
  %v228 = vadd.f32 0.0, %v227
  %229 = vdwg.mxu0
  %v230 = vadd.f32 %v37, %v191
  %v231 = vadd.f32 %v38, %v193
  %v232 = vadd.f32 %v39, %v196
  %v233 = vadd.f32 %v40, %v198
  %v234 = vadd.f32 %v41, %v201
  %v235 = vadd.f32 %v42, %v203
  %v236 = vadd.f32 %v43, %v206
  %v237 = vadd.f32 %v44, %v208
  %v238 = vadd.f32 %v45, %v211
  %v239 = vadd.f32 %v46, %v213
  %v240 = vadd.f32 %v47, %v216
  %v241 = vadd.f32 %v48, %v218
  %v242 = vadd.f32 %v49, %v221
  %v243 = vadd.f32 %v50, %v223
  %v244 = vadd.f32 %v51, %v226
  %v245 = vadd.f32 %v52, %v228
  %246 = vst [vmem:[#allocation2] sm:$0xff] %v230
  %247 = vst [vmem:[#allocation2 + $0x8] sm:$0xff] %v231
  %248 = vst [vmem:[#allocation2 + $0x10] sm:$0xff] %v232
  %249 = vst [vmem:[#allocation2 + $0x18] sm:$0xff] %v233
  %250 = vst [vmem:[#allocation2 + $0x20] sm:$0xff] %v234
  %251 = vst [vmem:[#allocation2 + $0x28] sm:$0xff] %v235
  %252 = vst [vmem:[#allocation2 + $0x30] sm:$0xff] %v236
  %253 = vst [vmem:[#allocation2 + $0x38] sm:$0xff] %v237
  %254 = vst [vmem:[#allocation2 + $0x40] sm:$0xff] %v238
  %255 = vst [vmem:[#allocation2 + $0x48] sm:$0xff] %v239
  %256 = vst [vmem:[#allocation2 + $0x50] sm:$0xff] %v240
  %257 = vst [vmem:[#allocation2 + $0x58] sm:$0xff] %v241
  %258 = vst [vmem:[#allocation2 + $0x60] sm:$0xff] %v242
  %259 = vst [vmem:[#allocation2 + $0x68] sm:$0xff] %v243
  %260 = vst [vmem:[#allocation2 + $0x70] sm:$0xff] %v244
  %261 = vst [vmem:[#allocation2 + $0x78] sm:$0xff] %v245
  // Predicated region
  $region22: #{_bottleneck_forward.3} parent=0 // pred_check
    %p262 = pneg %p17
  $region23: #{_bottleneck_forward.3} parent=0 // pred_check_branch
    %264 = sbr.rel (%p262) target = $region25
  $region24: #{_bottleneck_forward.3} parent=0 // pred_region
    %v265 = vld [vmem:[#allocation2] sm:$0xff]
    %v266 = vld [vmem:[#allocation2 + $0x8] sm:$0xff]
    %v267 = vld [vmem:[#allocation2 + $0x10] sm:$0xff]
    %v268 = vld [vmem:[#allocation2 + $0x18] sm:$0xff]
    %v269 = vld [vmem:[#allocation2 + $0x20] sm:$0xff]
    %v270 = vld [vmem:[#allocation2 + $0x28] sm:$0xff]
    %v271 = vld [vmem:[#allocation2 + $0x30] sm:$0xff]
    %v272 = vld [vmem:[#allocation2 + $0x38] sm:$0xff]
    %v273 = vld [vmem:[#allocation2 + $0x40] sm:$0xff]
    %v274 = vld [vmem:[#allocation2 + $0x48] sm:$0xff]
    %v275 = vld [vmem:[#allocation2 + $0x50] sm:$0xff]
    %v276 = vld [vmem:[#allocation2 + $0x58] sm:$0xff]
    %v277 = vld [vmem:[#allocation2 + $0x60] sm:$0xff]
    %v278 = vld [vmem:[#allocation2 + $0x68] sm:$0xff]
    %v279 = vld [vmem:[#allocation2 + $0x70] sm:$0xff]
    %v280 = vld [vmem:[#allocation2 + $0x78] sm:$0xff]
    %v281 = vld [vmem:[%s2] sm:$0x1]
    %v283 = vperm.slane %v281, 0
    %v285 = vmul.f32 %v265, %v283
    %v286 = vmul.f32 %v266, %v283
    %v287 = vmul.f32 %v267, %v283
    %v288 = vmul.f32 %v268, %v283
    %v289 = vmul.f32 %v269, %v283
    %v290 = vmul.f32 %v270, %v283
    %v291 = vmul.f32 %v271, %v283
    %v292 = vmul.f32 %v272, %v283
    %v293 = vmul.f32 %v273, %v283
    %v294 = vmul.f32 %v274, %v283
    %v295 = vmul.f32 %v275, %v283
    %v296 = vmul.f32 %v276, %v283
    %v297 = vmul.f32 %v277, %v283
    %v298 = vmul.f32 %v278, %v283
    %v299 = vmul.f32 %v279, %v283
    %v300 = vmul.f32 %v280, %v283
    %v301 = vld [vmem:[%s3] sm:$0x1]
    %v303 = vperm.slane %v301, 0
    %v305 = vadd.f32 %v285, %v303
    %v306 = vadd.f32 %v286, %v303
    %v307 = vadd.f32 %v287, %v303
    %v308 = vadd.f32 %v288, %v303
    %v309 = vadd.f32 %v289, %v303
    %v310 = vadd.f32 %v290, %v303
    %v311 = vadd.f32 %v291, %v303
    %v312 = vadd.f32 %v292, %v303
    %v313 = vadd.f32 %v293, %v303
    %v314 = vadd.f32 %v294, %v303
    %v315 = vadd.f32 %v295, %v303
    %v316 = vadd.f32 %v296, %v303
    %v317 = vadd.f32 %v297, %v303
    %v318 = vadd.f32 %v298, %v303
    %v319 = vadd.f32 %v299, %v303
    %v320 = vadd.f32 %v300, %v303
    %v321 = vmax.f32 %v305, 0.0
    %v322 = vmax.f32 %v306, 0.0
    %v323 = vmax.f32 %v307, 0.0
    %v324 = vmax.f32 %v308, 0.0
    %v325 = vmax.f32 %v309, 0.0
    %v326 = vmax.f32 %v310, 0.0
    %v327 = vmax.f32 %v311, 0.0
    %v328 = vmax.f32 %v312, 0.0
    %v329 = vmax.f32 %v313, 0.0
    %v330 = vmax.f32 %v314, 0.0
    %v331 = vmax.f32 %v315, 0.0
    %v332 = vmax.f32 %v316, 0.0
    %v333 = vmax.f32 %v317, 0.0
    %v334 = vmax.f32 %v318, 0.0
    %v335 = vmax.f32 %v319, 0.0
    %v336 = vmax.f32 %v320, 0.0
    %v337 = vpack.c.bf16 %v321, %v321
    %v338 = vpack.c.bf16 %v322, %v322
    %v339 = vpack.c.bf16 %v323, %v323
    %v340 = vpack.c.bf16 %v324, %v324
    %v341 = vpack.c.bf16 %v325, %v325
    %v342 = vpack.c.bf16 %v326, %v326
    %v343 = vpack.c.bf16 %v327, %v327
    %v344 = vpack.c.bf16 %v328, %v328
    %v345 = vpack.c.bf16 %v329, %v329
    %v346 = vpack.c.bf16 %v330, %v330
    %v347 = vpack.c.bf16 %v331, %v331
    %v348 = vpack.c.bf16 %v332, %v332
    %v349 = vpack.c.bf16 %v333, %v333
    %v350 = vpack.c.bf16 %v334, %v334
    %v351 = vpack.c.bf16 %v335, %v335
    %v352 = vpack.c.bf16 %v336, %v336
    %353 = vst [vmem:[%s4] sm:$0xf] %v337
    %354 = vst [vmem:[%s4 + $0x4] sm:$0xf] %v338
    %355 = vst [vmem:[%s4 + $0x8] sm:$0xf] %v339
    %356 = vst [vmem:[%s4 + $0xc] sm:$0xf] %v340
    %357 = vst [vmem:[%s4 + $0x10] sm:$0xf] %v341
    %358 = vst [vmem:[%s4 + $0x14] sm:$0xf] %v342
    %359 = vst [vmem:[%s4 + $0x18] sm:$0xf] %v343
    %360 = vst [vmem:[%s4 + $0x1c] sm:$0xf] %v344
    %361 = vst [vmem:[%s4 + $0x20] sm:$0xf] %v345
    %362 = vst [vmem:[%s4 + $0x24] sm:$0xf] %v346
    %363 = vst [vmem:[%s4 + $0x28] sm:$0xf] %v347
    %364 = vst [vmem:[%s4 + $0x2c] sm:$0xf] %v348
    %365 = vst [vmem:[%s4 + $0x30] sm:$0xf] %v349
    %366 = vst [vmem:[%s4 + $0x34] sm:$0xf] %v350
    %367 = vst [vmem:[%s4 + $0x38] sm:$0xf] %v351
    %368 = vst [vmem:[%s4 + $0x3c] sm:$0xf] %v352
  $region25: #{_bottleneck_forward.3} parent=0 // pred_fallthru
    _
  // Predicated region
  $region26: #{_bottleneck_forward.3} parent=0 // pred_check
    _
  $region27: #{_bottleneck_forward.3} parent=0 // pred_check_branch
    %370 = sbr.rel (0) target = $region29
  $region28: #{_bottleneck_forward.3} parent=0 // pred_region
    _
  $region29: #{_bottleneck_forward.3} parent=0 // pred_fallthru
    _
  // Predicated region
  $region30: #{_bottleneck_forward.3} parent=0 // pred_check
    _
  $region31: #{_bottleneck_forward.3} parent=0 // pred_check_branch
    %372 = sbr.rel (0) target = $region33
  $region32: #{_bottleneck_forward.3} parent=0 // pred_region
    _
  $region33: #{_bottleneck_forward.3} parent=0 // pred_fallthru
    _

// kernel: _bottleneck_forward.4
$region0: #{_bottleneck_forward.4}
  #allocation0 [shape = 'u32[]', space=smem, size = 0x4, offset = 0x4, fixed_abs, tag = 'smem constant byte address 0x4 - core index']
  #allocation1 [shape = 'u32[72,128]{1,0:T(1,128)}', space=vmem, size = 0x9000, scoped, tag = 'internal scratch']
  %s0 = inlined_call_operand.vmem [shape: bf16[2,2,2,48,128], index: 0, kind: input, shape index: {}]
  %s1 = inlined_call_operand.vmem [shape: bf16[3,3,128,128], index: 1, kind: input, shape index: {}]
  %s2 = inlined_call_operand.vmem [shape: f32[1,128], index: 2, kind: input, shape index: {}]
  %s3 = inlined_call_operand.vmem [shape: f32[1,128], index: 3, kind: input, shape index: {}]
  %s4 = inlined_call_operand.vmem [shape: bf16[2,32,128], index: 4, kind: output, shape index: {}]
  %s5 = sld [smem:[#allocation0]]
  $region49: #{_bottleneck_forward.4} parent=0
    _
  %s7 = ssub.s32 1, %s5
  %s8 = scalar_select 0, %s7, %s5
  loop: start=0, step=1, limit=4
  $region2: #{_bottleneck_forward.4} parent=0 // loop_pre_header
    _
  $region3: #{_bottleneck_forward.4} parent=0 // loop_header
    %s10 = sphi 0, %s14
    %p11 = scmp.ge.s32.totalorder %s10, 4
    %s20 = sphi 0, %s22
    %s23 = sphi 0, %s20
    %s24 = sphi 0, %s23
    %s40 = sphi 0, %s24
    %s44 = sphi 0, %s44
    %s46 = sphi 0, %s44
    %s47 = sphi 0, %s46
    %s61 = sphi 0, %s47
    %s65 = sphi 0, %s65
    %s67 = sphi 0, %s65
    %s68 = sphi 0, %s67
    %s82 = sphi 0, %s68
    %s86 = sphi 0, %s86
    %s88 = sphi 0, %s86
    %s89 = sphi 0, %s88
    %s103 = sphi 0, %s89
    %s109 = sphi 0, %s111
    %s112 = sphi 0, %s109
    %s113 = sphi 0, %s112
    %s129 = sphi 0, %s113
  $region4: #{_bottleneck_forward.4} parent=0 // loop_header_branch
    %13 = sbr.rel (%p11) target = $region8
  $region5: #{_bottleneck_forward.4} parent=0 // loop_body
    %s15 = ssub.s32 %s10, 1
    %s16 = ssub.s32 %s10, 2
    %s17 = sadd.s32 %s10, 1
    %s18 = ssub.s32 %s10, %s17
    %p19 = scmp.eq.s32.totalorder %s18, 0
    %s21 = sadd.s32 %s20, 1
    %s22 = scalar_select %p19, %s20, %s21
    %p25 = pneg %p19
    %p26 = scmp.eq.s32.totalorder %s10, 1
    %p27 = por %p25, %p26
    %p28 = scmp.ne.s32.totalorder %s20, %s23
    %p29 = scmp.eq.s32.totalorder %s10, 0
    %p30 = por %p28, %p29
    %p31 = scmp.ne.s32.totalorder %s20, %s23
    %p32 = scmp.eq.s32.totalorder %s15, 1
    %p33 = por %p31, %p32
    %p34 = scmp.ne.s32.totalorder %s23, %s24
    %p35 = scmp.eq.s32.totalorder %s15, 0
    %p36 = por %p34, %p35
    %p37 = scmp.ne.s32.totalorder %s23, %s24
    %p38 = scmp.eq.s32.totalorder %s16, 1
    %p39 = por %p37, %p38
    %p41 = scmp.ne.s32.totalorder %s24, %s40
    %p42 = scmp.eq.s32.totalorder %s16, 0
    %p43 = por %p41, %p42
    %s45 = sadd.s32 %s44, 1
    %p48 = scmp.eq.s32.totalorder %s10, 1
    %p49 = scmp.ne.s32.totalorder %s44, %s46
    %p50 = scmp.eq.s32.totalorder %s10, 0
    %p51 = por %p49, %p50
    %p52 = scmp.ne.s32.totalorder %s44, %s46
    %p53 = scmp.eq.s32.totalorder %s15, 1
    %p54 = por %p52, %p53
    %p55 = scmp.ne.s32.totalorder %s46, %s47
    %p56 = scmp.eq.s32.totalorder %s15, 0
    %p57 = por %p55, %p56
    %p58 = scmp.ne.s32.totalorder %s46, %s47
    %p59 = scmp.eq.s32.totalorder %s16, 1
    %p60 = por %p58, %p59
    %p62 = scmp.ne.s32.totalorder %s47, %s61
    %p63 = scmp.eq.s32.totalorder %s16, 0
    %p64 = por %p62, %p63
    %s66 = sadd.s32 %s65, 1
    %p69 = scmp.eq.s32.totalorder %s10, 1
    %p70 = scmp.ne.s32.totalorder %s65, %s67
    %p71 = scmp.eq.s32.totalorder %s10, 0
    %p72 = por %p70, %p71
    %p73 = scmp.ne.s32.totalorder %s65, %s67
    %p74 = scmp.eq.s32.totalorder %s15, 1
    %p75 = por %p73, %p74
    %p76 = scmp.ne.s32.totalorder %s67, %s68
    %p77 = scmp.eq.s32.totalorder %s15, 0
    %p78 = por %p76, %p77
    %p79 = scmp.ne.s32.totalorder %s67, %s68
    %p80 = scmp.eq.s32.totalorder %s16, 1
    %p81 = por %p79, %p80
    %p83 = scmp.ne.s32.totalorder %s68, %s82
    %p84 = scmp.eq.s32.totalorder %s16, 0
    %p85 = por %p83, %p84
    %s87 = sadd.s32 %s86, 1
    %p90 = scmp.eq.s32.totalorder %s10, 1
    %p91 = scmp.ne.s32.totalorder %s86, %s88
    %p92 = scmp.eq.s32.totalorder %s10, 0
    %p93 = por %p91, %p92
    %p94 = scmp.ne.s32.totalorder %s86, %s88
    %p95 = scmp.eq.s32.totalorder %s15, 1
    %p96 = por %p94, %p95
    %p97 = scmp.ne.s32.totalorder %s88, %s89
    %p98 = scmp.eq.s32.totalorder %s15, 0
    %p99 = por %p97, %p98
    %p100 = scmp.ne.s32.totalorder %s88, %s89
    %p101 = scmp.eq.s32.totalorder %s16, 1
    %p102 = por %p100, %p101
    %p104 = scmp.ne.s32.totalorder %s89, %s103
    %p105 = scmp.eq.s32.totalorder %s16, 0
    %p106 = por %p104, %p105
    %s107 = ssub.s32 %s10, %s17
    %p108 = scmp.eq.s32.totalorder %s107, 0
    %s110 = sadd.s32 %s109, 1
    %s111 = scalar_select %p108, %s109, %s110
    %p114 = pneg %p108
    %p115 = scmp.eq.s32.totalorder %s10, 1
    %p116 = por %p114, %p115
    %p117 = scmp.ne.s32.totalorder %s109, %s112
    %p118 = scmp.eq.s32.totalorder %s10, 0
    %p119 = por %p117, %p118
    %p120 = scmp.ne.s32.totalorder %s109, %s112
    %p121 = scmp.eq.s32.totalorder %s15, 1
    %p122 = por %p120, %p121
    %p123 = scmp.ne.s32.totalorder %s112, %s113
    %p124 = scmp.eq.s32.totalorder %s15, 0
    %p125 = por %p123, %p124
    %p126 = scmp.ne.s32.totalorder %s112, %s113
    %p127 = scmp.eq.s32.totalorder %s16, 1
    %p128 = por %p126, %p127
    %p130 = scmp.ne.s32.totalorder %s113, %s129
    %p131 = scmp.eq.s32.totalorder %s16, 0
    %p132 = por %p130, %p131
    %p133 = scmp.le.s32.totalorder 1, %s10
    %p134 = scmp.lt.s32.totalorder %s10, 3
    %p135 = pnand %p133, %p134
    %p136 = pneg %p135
    // Predicated region
    $region9: #{_bottleneck_forward.4} parent=5 // pred_check
      _
    $region10: #{_bottleneck_forward.4} parent=5 // pred_check_branch
      %138 = sbr.rel (%p135) target = $region12
    $region11: #{_bottleneck_forward.4} parent=5 // pred_region
      %s139 = ssub.s32 %s10, 1
      // Predicated region
      $region13: #{_bottleneck_forward.4} parent=11 // pred_check
        %p140 = pneg %p57
      $region14: #{_bottleneck_forward.4} parent=11 // pred_check_branch
        %142 = sbr.rel (%p140) target = $region16
      $region15: #{_bottleneck_forward.4} parent=11 // pred_region
        _
      $region16: #{_bottleneck_forward.4} parent=11 // pred_fallthru
        _
      // Predicated region
      $region17: #{_bottleneck_forward.4} parent=11 // pred_check
        %p143 = pneg %p78
      $region18: #{_bottleneck_forward.4} parent=11 // pred_check_branch
        %145 = sbr.rel (%p143) target = $region20
      $region19: #{_bottleneck_forward.4} parent=11 // pred_region
        _
      $region20: #{_bottleneck_forward.4} parent=11 // pred_fallthru
        _
      // Predicated region
      $region21: #{_bottleneck_forward.4} parent=11 // pred_check
        %p146 = pneg %p99
      $region22: #{_bottleneck_forward.4} parent=11 // pred_check_branch
        %148 = sbr.rel (%p146) target = $region24
      $region23: #{_bottleneck_forward.4} parent=11 // pred_region
        _
      $region24: #{_bottleneck_forward.4} parent=11 // pred_fallthru
        _
    $region12: #{_bottleneck_forward.4} parent=5 // pred_fallthru
      _
    %p149 = scmp.lt.s32.totalorder %s10, 2
    // Predicated region
    $region25: #{_bottleneck_forward.4} parent=5 // pred_check
      %p150 = pneg %p149
    $region26: #{_bottleneck_forward.4} parent=5 // pred_check_branch
      %152 = sbr.rel (%p150) target = $region28
    $region27: #{_bottleneck_forward.4} parent=5 // pred_region
      // Predicated region
      $region29: #{_bottleneck_forward.4} parent=27 // pred_check
        %p153 = pneg %p30
      $region30: #{_bottleneck_forward.4} parent=27 // pred_check_branch
        %155 = sbr.rel (%p153) target = $region32
      $region31: #{_bottleneck_forward.4} parent=27 // pred_region
        %p156 = scmp.lt.s32.totalorder %s10, 1
        %s157 = scalar_select %p156, %s10, 1
        %s158 = smul.addr %s157, 24
        %s159 = smul.addr %s158, 4
        %s160 = scalar_lea.vmem %s0, %s159
      $region32: #{_bottleneck_forward.4} parent=27 // pred_fallthru
        _
    $region28: #{_bottleneck_forward.4} parent=5 // pred_fallthru
      _
    %p161 = scmp.le.s32.totalorder 1, %s10
    %p162 = scmp.lt.s32.totalorder %s10, 3
    %p163 = pnand %p161, %p162
    %p164 = pneg %p163
    // Predicated region
    $region33: #{_bottleneck_forward.4} parent=5 // pred_check
      _
    $region34: #{_bottleneck_forward.4} parent=5 // pred_check_branch
      %166 = sbr.rel (%p163) target = $region36
    $region35: #{_bottleneck_forward.4} parent=5 // pred_region
      %s167 = ssub.s32 %s10, 1
      %p168 = scmp.lt.s32.totalorder %s15, 1
      %s169 = scalar_select %p168, %s15, 1
      %s170 = smul.addr %s169, 24
      %s171 = smul.addr %s170, 4
      %s172 = scalar_lea.vmem %s0, %s171
      %p173 = pneg %p36
      %p174 = pneg %p33
      %p175 = pneg %p57
      %p176 = pneg %p54
      %p177 = pneg %p78
      %p178 = pneg %p75
      %p179 = pneg %p99
      %p180 = pneg %p96
      %p181 = pneg %p125
      %p182 = pneg %p122
      %p183 = scmp.lt.s32.totalorder %s15, 1
      %s184 = scalar_select %p183, %s15, 1
      %s185 = smul.addr %s184, 4
      %s186 = smul.addr %s185, 4
      %s187 = scalar_lea.vmem %s4, %s186
      %p188 = scmp.lt.s32.totalorder %s15, 1
      %s189 = scalar_select %p188, %s15, 1
      %s190 = smul.addr %s189, 24
      %s191 = smul.addr %s190, 4
      %s192 = scalar_lea.vmem %s0, %s191
      %p193 = scmp.lt.s32.totalorder %s15, 1
      %s194 = scalar_select %p193, %s15, 1
      %s195 = smul.addr %s194, 4
      %s196 = smul.addr %s195, 4
      %s197 = scalar_lea.vmem %s4, %s196
      %v198 = vld [vmem:[%s192] sm:$0xf]
      %v199 = vld [vmem:[%s192 + $0x4] sm:$0xf]
      %v200 = vld [vmem:[%s192 + $0x8] sm:$0xf]
      %v201 = vld [vmem:[%s192 + $0xc] sm:$0xf]
      %v202 = vld [vmem:[%s1] sm:$0xf]
      %v203 = vld [vmem:[%s1 + $0x4] sm:$0xf]
      %v204 = vld [vmem:[%s1 + $0x8] sm:$0xf]
      %v205 = vld [vmem:[%s1 + $0xc] sm:$0xf]
      %v206 = vld [vmem:[%s1 + $0x10] sm:$0xf]
      %v207 = vld [vmem:[%s1 + $0x14] sm:$0xf]
      %v208 = vld [vmem:[%s1 + $0x18] sm:$0xf]
      %v209 = vld [vmem:[%s1 + $0x1c] sm:$0xf]
      %v210 = vld [vmem:[%s1 + $0x20] sm:$0xf]
      %v211 = vld [vmem:[%s1 + $0x24] sm:$0xf]
      %v212 = vld [vmem:[%s1 + $0x28] sm:$0xf]
      %v213 = vld [vmem:[%s1 + $0x2c] sm:$0xf]
      %v214 = vld [vmem:[%s1 + $0x30] sm:$0xf]
      %v215 = vld [vmem:[%s1 + $0x34] sm:$0xf]
      %v216 = vld [vmem:[%s1 + $0x38] sm:$0xf]
      %v217 = vld [vmem:[%s1 + $0x3c] sm:$0xf]
      %s218 = scalar_lea.vmem %s192, 24
      %v219 = vld [vmem:[%s218] sm:$0xf]
      %v220 = vld [vmem:[%s218 + $0x4] sm:$0xf]
      %v221 = vld [vmem:[%s218 + $0x8] sm:$0xf]
      %v222 = vld [vmem:[%s218 + $0xc] sm:$0xf]
      %s223 = scalar_lea.vmem %s1, 64
      %v224 = vld [vmem:[%s223] sm:$0xf]
      %v225 = vld [vmem:[%s223 + $0x4] sm:$0xf]
      %v226 = vld [vmem:[%s223 + $0x8] sm:$0xf]
      %v227 = vld [vmem:[%s223 + $0xc] sm:$0xf]
      %v228 = vld [vmem:[%s223 + $0x10] sm:$0xf]
      %v229 = vld [vmem:[%s223 + $0x14] sm:$0xf]
      %v230 = vld [vmem:[%s223 + $0x18] sm:$0xf]
      %v231 = vld [vmem:[%s223 + $0x1c] sm:$0xf]
      %v232 = vld [vmem:[%s223 + $0x20] sm:$0xf]
      %v233 = vld [vmem:[%s223 + $0x24] sm:$0xf]
      %v234 = vld [vmem:[%s223 + $0x28] sm:$0xf]
      %v235 = vld [vmem:[%s223 + $0x2c] sm:$0xf]
      %v236 = vld [vmem:[%s223 + $0x30] sm:$0xf]
      %v237 = vld [vmem:[%s223 + $0x34] sm:$0xf]
      %v238 = vld [vmem:[%s223 + $0x38] sm:$0xf]
      %v239 = vld [vmem:[%s223 + $0x3c] sm:$0xf]
      %v244 = vunpack.c.l.b16 %v219
      %v245 = vunpack.c.l.b16 %v220
      %v246 = vunpack.c.l.b16 %v221
      %v247 = vunpack.c.l.b16 %v222
      %v248 = vpack.c.b16 %v245, %v244
      %v249 = vpack.c.b16 %v247, %v246
      %v268 = vunpack.c.l.b16 %v224
      %v269 = vunpack.c.l.b16 %v225
      %v270 = vunpack.c.l.b16 %v226
      %v271 = vunpack.c.l.b16 %v227
      %v272 = vunpack.c.l.b16 %v228
      %v273 = vunpack.c.l.b16 %v229
      %v274 = vunpack.c.l.b16 %v230
      %v275 = vunpack.c.l.b16 %v231
      %v276 = vunpack.c.l.b16 %v232
      %v277 = vunpack.c.l.b16 %v233
      %v278 = vunpack.c.l.b16 %v234
      %v279 = vunpack.c.l.b16 %v235
      %v280 = vunpack.c.l.b16 %v236
      %v281 = vunpack.c.l.b16 %v237
      %v282 = vunpack.c.l.b16 %v238
      %v283 = vunpack.c.l.b16 %v239
      %v284 = vpack.c.b16 %v269, %v268
      %v285 = vpack.c.b16 %v271, %v270
      %v286 = vpack.c.b16 %v273, %v272
      %v287 = vpack.c.b16 %v275, %v274
      %v288 = vpack.c.b16 %v277, %v276
      %v289 = vpack.c.b16 %v279, %v278
      %v290 = vpack.c.b16 %v281, %v280
      %v291 = vpack.c.b16 %v283, %v282
      %300 = vmatpush.bf16.msra.mxu0 %v291
      %301 = vmatpush.bf16.msra.mxu0 %v290
      %302 = vmatpush.bf16.msra.mxu0 %v289
      %303 = vmatpush.bf16.msra.mxu0 %v288
      %304 = vmatpush.bf16.msra.mxu0 %v287
      %305 = vmatpush.bf16.msra.mxu0 %v286
      %306 = vmatpush.bf16.msra.mxu0 %v285
      %307 = vmatpush.bf16.msra.mxu0 %v284
      %308 = vmatmul.bf16.gmra.mxu0 %v248
      %v309 = vpop.f32.mrf.mxu0
      %v310 = vadd.f32 0.0, %v309
      %v311 = vpop.f32.mrf.mxu0
      %v312 = vadd.f32 0.0, %v311
      %313 = vmatmul.bf16.gmra.mxu0 %v249
      %v314 = vpop.f32.mrf.mxu0
      %v315 = vadd.f32 0.0, %v314
      %v316 = vpop.f32.mrf.mxu0
      %v317 = vadd.f32 0.0, %v316
      %318 = vdwg.mxu0
      %v323 = vunpack.c.l.b16 %v198
      %v324 = vunpack.c.l.b16 %v199
      %v325 = vunpack.c.l.b16 %v200
      %v326 = vunpack.c.l.b16 %v201
      %v327 = vpack.c.b16 %v324, %v323
      %v328 = vpack.c.b16 %v326, %v325
      %v347 = vunpack.c.l.b16 %v202
      %v348 = vunpack.c.l.b16 %v203
      %v349 = vunpack.c.l.b16 %v204
      %v350 = vunpack.c.l.b16 %v205
      %v351 = vunpack.c.l.b16 %v206
      %v352 = vunpack.c.l.b16 %v207
      %v353 = vunpack.c.l.b16 %v208
      %v354 = vunpack.c.l.b16 %v209
      %v355 = vunpack.c.l.b16 %v210
      %v356 = vunpack.c.l.b16 %v211
      %v357 = vunpack.c.l.b16 %v212
      %v358 = vunpack.c.l.b16 %v213
      %v359 = vunpack.c.l.b16 %v214
      %v360 = vunpack.c.l.b16 %v215
      %v361 = vunpack.c.l.b16 %v216
      %v362 = vunpack.c.l.b16 %v217
      %v363 = vpack.c.b16 %v348, %v347
      %v364 = vpack.c.b16 %v350, %v349
      %v365 = vpack.c.b16 %v352, %v351
      %v366 = vpack.c.b16 %v354, %v353
      %v367 = vpack.c.b16 %v356, %v355
      %v368 = vpack.c.b16 %v358, %v357
      %v369 = vpack.c.b16 %v360, %v359
      %v370 = vpack.c.b16 %v362, %v361
      %379 = vmatpush.bf16.msra.mxu0 %v370
      %380 = vmatpush.bf16.msra.mxu0 %v369
      %381 = vmatpush.bf16.msra.mxu0 %v368
      %382 = vmatpush.bf16.msra.mxu0 %v367
      %383 = vmatpush.bf16.msra.mxu0 %v366
      %384 = vmatpush.bf16.msra.mxu0 %v365
      %385 = vmatpush.bf16.msra.mxu0 %v364
      %386 = vmatpush.bf16.msra.mxu0 %v363
      %387 = vmatmul.bf16.gmra.mxu0 %v327
      %v388 = vpop.f32.mrf.mxu0
      %v389 = vadd.f32 %v310, %v388
      %v390 = vpop.f32.mrf.mxu0
      %v391 = vadd.f32 %v312, %v390
      %392 = vmatmul.bf16.gmra.mxu0 %v328
      %v393 = vpop.f32.mrf.mxu0
      %v394 = vadd.f32 %v315, %v393
      %v395 = vpop.f32.mrf.mxu0
      %v396 = vadd.f32 %v317, %v395
      %397 = vdwg.mxu0
      %v398 = vld [vmem:[%s192] sm:$0xf]
      %v399 = vld [vmem:[%s192 + $0x4] sm:$0xf]
      %v400 = vld [vmem:[%s192 + $0x8] sm:$0xf]
      %v401 = vld [vmem:[%s192 + $0xc] sm:$0xf]
      %v402 = vld [vmem:[%s192 + $0x10] sm:$0x1]
      %s403 = scalar_lea.vmem %s1, 128
      %v404 = vld [vmem:[%s403] sm:$0xf]
      %v405 = vld [vmem:[%s403 + $0x4] sm:$0xf]
      %v406 = vld [vmem:[%s403 + $0x8] sm:$0xf]
      %v407 = vld [vmem:[%s403 + $0xc] sm:$0xf]
      %v408 = vld [vmem:[%s403 + $0x10] sm:$0xf]
      %v409 = vld [vmem:[%s403 + $0x14] sm:$0xf]
      %v410 = vld [vmem:[%s403 + $0x18] sm:$0xf]
      %v411 = vld [vmem:[%s403 + $0x1c] sm:$0xf]
      %v412 = vld [vmem:[%s403 + $0x20] sm:$0xf]
      %v413 = vld [vmem:[%s403 + $0x24] sm:$0xf]
      %v414 = vld [vmem:[%s403 + $0x28] sm:$0xf]
      %v415 = vld [vmem:[%s403 + $0x2c] sm:$0xf]
      %v416 = vld [vmem:[%s403 + $0x30] sm:$0xf]
      %v417 = vld [vmem:[%s403 + $0x34] sm:$0xf]
      %v418 = vld [vmem:[%s403 + $0x38] sm:$0xf]
      %v419 = vld [vmem:[%s403 + $0x3c] sm:$0xf]
      %v425 = vunpack.c.l.b16 %v398
      %v426 = vunpack.c.l.b16 %v399
      %v427 = vunpack.c.l.b16 %v400
      %v428 = vunpack.c.l.b16 %v401
      %v429 = vunpack.c.l.b16 %v402
      %v430 = vpack.c.b16 %v426, %v425
      %v431 = vpack.c.b16 %v428, %v427
      %v432 = vpack.c.b16 %v429, %v429
      %vm433 = vsmask.f32 7424
      %v435 = vshrl.u32 %v430, 16
      %v437 = vshll.u32 %v430, 16
      %v439 = vrot.slane %v437, 1
      %v440 = vor.u32 %v435, %v439
      %v442 = vshll.u32 %v431, 16
      %v444 = vrot.slane %v442, 1
      %v445 = vsel %vm433, %v440, %v444
      %v446 = vshrl.u32 %v431, 16
      %v448 = vor.u32 %v446, %v444
      %v450 = vshll.u32 %v432, 16
      %v452 = vrot.slane %v450, 1
      %v453 = vsel %vm433, %v448, %v452
      %v472 = vunpack.c.l.b16 %v404
      %v473 = vunpack.c.l.b16 %v405
      %v474 = vunpack.c.l.b16 %v406
      %v475 = vunpack.c.l.b16 %v407
      %v476 = vunpack.c.l.b16 %v408
      %v477 = vunpack.c.l.b16 %v409
      %v478 = vunpack.c.l.b16 %v410
      %v479 = vunpack.c.l.b16 %v411
      %v480 = vunpack.c.l.b16 %v412
      %v481 = vunpack.c.l.b16 %v413
      %v482 = vunpack.c.l.b16 %v414
      %v483 = vunpack.c.l.b16 %v415
      %v484 = vunpack.c.l.b16 %v416
      %v485 = vunpack.c.l.b16 %v417
      %v486 = vunpack.c.l.b16 %v418
      %v487 = vunpack.c.l.b16 %v419
      %v488 = vpack.c.b16 %v473, %v472
      %v489 = vpack.c.b16 %v475, %v474
      %v490 = vpack.c.b16 %v477, %v476
      %v491 = vpack.c.b16 %v479, %v478
      %v492 = vpack.c.b16 %v481, %v480
      %v493 = vpack.c.b16 %v483, %v482
      %v494 = vpack.c.b16 %v485, %v484
      %v495 = vpack.c.b16 %v487, %v486
      %504 = vmatpush.bf16.msra.mxu0 %v495
      %505 = vmatpush.bf16.msra.mxu0 %v494
      %506 = vmatpush.bf16.msra.mxu0 %v493
      %507 = vmatpush.bf16.msra.mxu0 %v492
      %508 = vmatpush.bf16.msra.mxu0 %v491
      %509 = vmatpush.bf16.msra.mxu0 %v490
      %510 = vmatpush.bf16.msra.mxu0 %v489
      %511 = vmatpush.bf16.msra.mxu0 %v488
      %512 = vmatmul.bf16.gmra.mxu0 %v445
      %v513 = vpop.f32.mrf.mxu0
      %v514 = vadd.f32 0.0, %v513
      %v515 = vpop.f32.mrf.mxu0
      %v516 = vadd.f32 0.0, %v515
      %517 = vmatmul.bf16.gmra.mxu0 %v453
      %v518 = vpop.f32.mrf.mxu0
      %v519 = vadd.f32 0.0, %v518
      %v520 = vpop.f32.mrf.mxu0
      %v521 = vadd.f32 0.0, %v520
      %522 = vdwg.mxu0
      %v523 = vadd.f32 %v389, %v514
      %v524 = vadd.f32 %v391, %v516
      %v525 = vadd.f32 %v394, %v519
      %v526 = vadd.f32 %v396, %v521
      %s527 = scalar_lea.vmem %s192, 48
      %v528 = vld [vmem:[%s527] sm:$0xf]
      %v529 = vld [vmem:[%s527 + $0x4] sm:$0xf]
      %v530 = vld [vmem:[%s527 + $0x8] sm:$0xf]
      %v531 = vld [vmem:[%s527 + $0xc] sm:$0xf]
      %s532 = scalar_lea.vmem %s1, 192
      %v533 = vld [vmem:[%s532] sm:$0xf]
      %v534 = vld [vmem:[%s532 + $0x4] sm:$0xf]
      %v535 = vld [vmem:[%s532 + $0x8] sm:$0xf]
      %v536 = vld [vmem:[%s532 + $0xc] sm:$0xf]
      %v537 = vld [vmem:[%s532 + $0x10] sm:$0xf]
      %v538 = vld [vmem:[%s532 + $0x14] sm:$0xf]
      %v539 = vld [vmem:[%s532 + $0x18] sm:$0xf]
      %v540 = vld [vmem:[%s532 + $0x1c] sm:$0xf]
      %v541 = vld [vmem:[%s532 + $0x20] sm:$0xf]
      %v542 = vld [vmem:[%s532 + $0x24] sm:$0xf]
      %v543 = vld [vmem:[%s532 + $0x28] sm:$0xf]
      %v544 = vld [vmem:[%s532 + $0x2c] sm:$0xf]
      %v545 = vld [vmem:[%s532 + $0x30] sm:$0xf]
      %v546 = vld [vmem:[%s532 + $0x34] sm:$0xf]
      %v547 = vld [vmem:[%s532 + $0x38] sm:$0xf]
      %v548 = vld [vmem:[%s532 + $0x3c] sm:$0xf]
      %v553 = vunpack.c.l.b16 %v528
      %v554 = vunpack.c.l.b16 %v529
      %v555 = vunpack.c.l.b16 %v530
      %v556 = vunpack.c.l.b16 %v531
      %v557 = vpack.c.b16 %v554, %v553
      %v558 = vpack.c.b16 %v556, %v555
      %v577 = vunpack.c.l.b16 %v533
      %v578 = vunpack.c.l.b16 %v534
      %v579 = vunpack.c.l.b16 %v535
      %v580 = vunpack.c.l.b16 %v536
      %v581 = vunpack.c.l.b16 %v537
      %v582 = vunpack.c.l.b16 %v538
      %v583 = vunpack.c.l.b16 %v539
      %v584 = vunpack.c.l.b16 %v540
      %v585 = vunpack.c.l.b16 %v541
      %v586 = vunpack.c.l.b16 %v542
      %v587 = vunpack.c.l.b16 %v543
      %v588 = vunpack.c.l.b16 %v544
      %v589 = vunpack.c.l.b16 %v545
      %v590 = vunpack.c.l.b16 %v546
      %v591 = vunpack.c.l.b16 %v547
      %v592 = vunpack.c.l.b16 %v548
      %v593 = vpack.c.b16 %v578, %v577
      %v594 = vpack.c.b16 %v580, %v579
      %v595 = vpack.c.b16 %v582, %v581
      %v596 = vpack.c.b16 %v584, %v583
      %v597 = vpack.c.b16 %v586, %v585
      %v598 = vpack.c.b16 %v588, %v587
      %v599 = vpack.c.b16 %v590, %v589
      %v600 = vpack.c.b16 %v592, %v591
      %609 = vmatpush.bf16.msra.mxu0 %v600
      %610 = vmatpush.bf16.msra.mxu0 %v599
      %611 = vmatpush.bf16.msra.mxu0 %v598
      %612 = vmatpush.bf16.msra.mxu0 %v597
      %613 = vmatpush.bf16.msra.mxu0 %v596
      %614 = vmatpush.bf16.msra.mxu0 %v595
      %615 = vmatpush.bf16.msra.mxu0 %v594
      %616 = vmatpush.bf16.msra.mxu0 %v593
      %617 = vmatmul.bf16.gmra.mxu0 %v557
      %v618 = vpop.f32.mrf.mxu0
      %v619 = vadd.f32 0.0, %v618
      %v620 = vpop.f32.mrf.mxu0
      %v621 = vadd.f32 0.0, %v620
      %622 = vmatmul.bf16.gmra.mxu0 %v558
      %v623 = vpop.f32.mrf.mxu0
      %v624 = vadd.f32 0.0, %v623
      %v625 = vpop.f32.mrf.mxu0
      %v626 = vadd.f32 0.0, %v625
      %627 = vdwg.mxu0
      %v628 = vadd.f32 %v523, %v619
      %v629 = vadd.f32 %v524, %v621
      %v630 = vadd.f32 %v525, %v624
      %v631 = vadd.f32 %v526, %v626
      %s632 = scalar_lea.vmem %s192, 72
      %v633 = vld [vmem:[%s632] sm:$0xf]
      %v634 = vld [vmem:[%s632 + $0x4] sm:$0xf]
      %v635 = vld [vmem:[%s632 + $0x8] sm:$0xf]
      %v636 = vld [vmem:[%s632 + $0xc] sm:$0xf]
      %s637 = scalar_lea.vmem %s1, 256
      %v638 = vld [vmem:[%s637] sm:$0xf]
      %v639 = vld [vmem:[%s637 + $0x4] sm:$0xf]
      %v640 = vld [vmem:[%s637 + $0x8] sm:$0xf]
      %v641 = vld [vmem:[%s637 + $0xc] sm:$0xf]
      %v642 = vld [vmem:[%s637 + $0x10] sm:$0xf]
      %v643 = vld [vmem:[%s637 + $0x14] sm:$0xf]
      %v644 = vld [vmem:[%s637 + $0x18] sm:$0xf]
      %v645 = vld [vmem:[%s637 + $0x1c] sm:$0xf]
      %v646 = vld [vmem:[%s637 + $0x20] sm:$0xf]
      %v647 = vld [vmem:[%s637 + $0x24] sm:$0xf]
      %v648 = vld [vmem:[%s637 + $0x28] sm:$0xf]
      %v649 = vld [vmem:[%s637 + $0x2c] sm:$0xf]
      %v650 = vld [vmem:[%s637 + $0x30] sm:$0xf]
      %v651 = vld [vmem:[%s637 + $0x34] sm:$0xf]
      %v652 = vld [vmem:[%s637 + $0x38] sm:$0xf]
      %v653 = vld [vmem:[%s637 + $0x3c] sm:$0xf]
      %v658 = vunpack.c.l.b16 %v633
      %v659 = vunpack.c.l.b16 %v634
      %v660 = vunpack.c.l.b16 %v635
      %v661 = vunpack.c.l.b16 %v636
      %v662 = vpack.c.b16 %v659, %v658
      %v663 = vpack.c.b16 %v661, %v660
      %v682 = vunpack.c.l.b16 %v638
      %v683 = vunpack.c.l.b16 %v639
      %v684 = vunpack.c.l.b16 %v640
      %v685 = vunpack.c.l.b16 %v641
      %v686 = vunpack.c.l.b16 %v642
      %v687 = vunpack.c.l.b16 %v643
      %v688 = vunpack.c.l.b16 %v644
      %v689 = vunpack.c.l.b16 %v645
      %v690 = vunpack.c.l.b16 %v646
      %v691 = vunpack.c.l.b16 %v647
      %v692 = vunpack.c.l.b16 %v648
      %v693 = vunpack.c.l.b16 %v649
      %v694 = vunpack.c.l.b16 %v650
      %v695 = vunpack.c.l.b16 %v651
      %v696 = vunpack.c.l.b16 %v652
      %v697 = vunpack.c.l.b16 %v653
      %v698 = vpack.c.b16 %v683, %v682
      %v699 = vpack.c.b16 %v685, %v684
      %v700 = vpack.c.b16 %v687, %v686
      %v701 = vpack.c.b16 %v689, %v688
      %v702 = vpack.c.b16 %v691, %v690
      %v703 = vpack.c.b16 %v693, %v692
      %v704 = vpack.c.b16 %v695, %v694
      %v705 = vpack.c.b16 %v697, %v696
      %714 = vmatpush.bf16.msra.mxu0 %v705
      %715 = vmatpush.bf16.msra.mxu0 %v704
      %716 = vmatpush.bf16.msra.mxu0 %v703
      %717 = vmatpush.bf16.msra.mxu0 %v702
      %718 = vmatpush.bf16.msra.mxu0 %v701
      %719 = vmatpush.bf16.msra.mxu0 %v700
      %720 = vmatpush.bf16.msra.mxu0 %v699
      %721 = vmatpush.bf16.msra.mxu0 %v698
      %722 = vmatmul.bf16.gmra.mxu0 %v662
      %v723 = vpop.f32.mrf.mxu0
      %v724 = vadd.f32 0.0, %v723
      %v725 = vpop.f32.mrf.mxu0
      %v726 = vadd.f32 0.0, %v725
      %727 = vmatmul.bf16.gmra.mxu0 %v663
      %v728 = vpop.f32.mrf.mxu0
      %v729 = vadd.f32 0.0, %v728
      %v730 = vpop.f32.mrf.mxu0
      %v731 = vadd.f32 0.0, %v730
      %732 = vdwg.mxu0
      %v733 = vadd.f32 %v628, %v724
      %v734 = vadd.f32 %v629, %v726
      %v735 = vadd.f32 %v630, %v729
      %v736 = vadd.f32 %v631, %v731
      %v737 = vld [vmem:[%s527] sm:$0xf]
      %v738 = vld [vmem:[%s527 + $0x4] sm:$0xf]
      %v739 = vld [vmem:[%s527 + $0x8] sm:$0xf]
      %v740 = vld [vmem:[%s527 + $0xc] sm:$0xf]
      %v741 = vld [vmem:[%s527 + $0x10] sm:$0x1]
      %s742 = scalar_lea.vmem %s1, 320
      %v743 = vld [vmem:[%s742] sm:$0xf]
      %v744 = vld [vmem:[%s742 + $0x4] sm:$0xf]
      %v745 = vld [vmem:[%s742 + $0x8] sm:$0xf]
      %v746 = vld [vmem:[%s742 + $0xc] sm:$0xf]
      %v747 = vld [vmem:[%s742 + $0x10] sm:$0xf]
      %v748 = vld [vmem:[%s742 + $0x14] sm:$0xf]
      %v749 = vld [vmem:[%s742 + $0x18] sm:$0xf]
      %v750 = vld [vmem:[%s742 + $0x1c] sm:$0xf]
      %v751 = vld [vmem:[%s742 + $0x20] sm:$0xf]
      %v752 = vld [vmem:[%s742 + $0x24] sm:$0xf]
      %v753 = vld [vmem:[%s742 + $0x28] sm:$0xf]
      %v754 = vld [vmem:[%s742 + $0x2c] sm:$0xf]
      %v755 = vld [vmem:[%s742 + $0x30] sm:$0xf]
      %v756 = vld [vmem:[%s742 + $0x34] sm:$0xf]
      %v757 = vld [vmem:[%s742 + $0x38] sm:$0xf]
      %v758 = vld [vmem:[%s742 + $0x3c] sm:$0xf]
      %v764 = vunpack.c.l.b16 %v737
      %v765 = vunpack.c.l.b16 %v738
      %v766 = vunpack.c.l.b16 %v739
      %v767 = vunpack.c.l.b16 %v740
      %v768 = vunpack.c.l.b16 %v741
      %v769 = vpack.c.b16 %v765, %v764
      %v770 = vpack.c.b16 %v767, %v766
      %v771 = vpack.c.b16 %v768, %v768
      %v773 = vshrl.u32 %v769, 16
      %v775 = vshll.u32 %v769, 16
      %v777 = vrot.slane %v775, 1
      %v778 = vor.u32 %v773, %v777
      %v780 = vshll.u32 %v770, 16
      %v782 = vrot.slane %v780, 1
      %v783 = vsel %vm433, %v778, %v782
      %v784 = vshrl.u32 %v770, 16
      %v786 = vor.u32 %v784, %v782
      %v788 = vshll.u32 %v771, 16
      %v790 = vrot.slane %v788, 1
      %v791 = vsel %vm433, %v786, %v790
      %v810 = vunpack.c.l.b16 %v743
      %v811 = vunpack.c.l.b16 %v744
      %v812 = vunpack.c.l.b16 %v745
      %v813 = vunpack.c.l.b16 %v746
      %v814 = vunpack.c.l.b16 %v747
      %v815 = vunpack.c.l.b16 %v748
      %v816 = vunpack.c.l.b16 %v749
      %v817 = vunpack.c.l.b16 %v750
      %v818 = vunpack.c.l.b16 %v751
      %v819 = vunpack.c.l.b16 %v752
      %v820 = vunpack.c.l.b16 %v753
      %v821 = vunpack.c.l.b16 %v754
      %v822 = vunpack.c.l.b16 %v755
      %v823 = vunpack.c.l.b16 %v756
      %v824 = vunpack.c.l.b16 %v757
      %v825 = vunpack.c.l.b16 %v758
      %v826 = vpack.c.b16 %v811, %v810
      %v827 = vpack.c.b16 %v813, %v812
      %v828 = vpack.c.b16 %v815, %v814
      %v829 = vpack.c.b16 %v817, %v816
      %v830 = vpack.c.b16 %v819, %v818
      %v831 = vpack.c.b16 %v821, %v820
      %v832 = vpack.c.b16 %v823, %v822
      %v833 = vpack.c.b16 %v825, %v824
      %842 = vmatpush.bf16.msra.mxu0 %v833
      %843 = vmatpush.bf16.msra.mxu0 %v832
      %844 = vmatpush.bf16.msra.mxu0 %v831
      %845 = vmatpush.bf16.msra.mxu0 %v830
      %846 = vmatpush.bf16.msra.mxu0 %v829
      %847 = vmatpush.bf16.msra.mxu0 %v828
      %848 = vmatpush.bf16.msra.mxu0 %v827
      %849 = vmatpush.bf16.msra.mxu0 %v826
      %850 = vmatmul.bf16.gmra.mxu0 %v783
      %v851 = vpop.f32.mrf.mxu0
      %v852 = vadd.f32 0.0, %v851
      %v853 = vpop.f32.mrf.mxu0
      %v854 = vadd.f32 0.0, %v853
      %855 = vmatmul.bf16.gmra.mxu0 %v791
      %v856 = vpop.f32.mrf.mxu0
      %v857 = vadd.f32 0.0, %v856
      %v858 = vpop.f32.mrf.mxu0
      %v859 = vadd.f32 0.0, %v858
      %860 = vdwg.mxu0
      %v861 = vadd.f32 %v733, %v852
      %v862 = vadd.f32 %v734, %v854
      %v863 = vadd.f32 %v735, %v857
      %v864 = vadd.f32 %v736, %v859
      %v865 = vld [vmem:[%s192 + $0x10] sm:$0xf]
      %s866 = scalar_lea.vmem %s1, 384
      %v867 = vld [vmem:[%s866] sm:$0xf]
      %v868 = vld [vmem:[%s866 + $0x4] sm:$0xf]
      %v869 = vld [vmem:[%s866 + $0x8] sm:$0xf]
      %v870 = vld [vmem:[%s866 + $0xc] sm:$0xf]
      %v871 = vld [vmem:[%s866 + $0x10] sm:$0xf]
      %v872 = vld [vmem:[%s866 + $0x14] sm:$0xf]
      %v873 = vld [vmem:[%s866 + $0x18] sm:$0xf]
      %v874 = vld [vmem:[%s866 + $0x1c] sm:$0xf]
      %v875 = vld [vmem:[%s866 + $0x20] sm:$0xf]
      %v876 = vld [vmem:[%s866 + $0x24] sm:$0xf]
      %v877 = vld [vmem:[%s866 + $0x28] sm:$0xf]
      %v878 = vld [vmem:[%s866 + $0x2c] sm:$0xf]
      %v879 = vld [vmem:[%s866 + $0x30] sm:$0xf]
      %v880 = vld [vmem:[%s866 + $0x34] sm:$0xf]
      %v881 = vld [vmem:[%s866 + $0x38] sm:$0xf]
      %v882 = vld [vmem:[%s866 + $0x3c] sm:$0xf]
      %v884 = vunpack.c.l.b16 %v865
      %v885 = vpack.c.b16 %v427, %v426
      %v886 = vpack.c.b16 %v884, %v428
      %v905 = vunpack.c.l.b16 %v867
      %v906 = vunpack.c.l.b16 %v868
      %v907 = vunpack.c.l.b16 %v869
      %v908 = vunpack.c.l.b16 %v870
      %v909 = vunpack.c.l.b16 %v871
      %v910 = vunpack.c.l.b16 %v872
      %v911 = vunpack.c.l.b16 %v873
      %v912 = vunpack.c.l.b16 %v874
      %v913 = vunpack.c.l.b16 %v875
      %v914 = vunpack.c.l.b16 %v876
      %v915 = vunpack.c.l.b16 %v877
      %v916 = vunpack.c.l.b16 %v878
      %v917 = vunpack.c.l.b16 %v879
      %v918 = vunpack.c.l.b16 %v880
      %v919 = vunpack.c.l.b16 %v881
      %v920 = vunpack.c.l.b16 %v882
      %v921 = vpack.c.b16 %v906, %v905
      %v922 = vpack.c.b16 %v908, %v907
      %v923 = vpack.c.b16 %v910, %v909
      %v924 = vpack.c.b16 %v912, %v911
      %v925 = vpack.c.b16 %v914, %v913
      %v926 = vpack.c.b16 %v916, %v915
      %v927 = vpack.c.b16 %v918, %v917
      %v928 = vpack.c.b16 %v920, %v919
      %937 = vmatpush.bf16.msra.mxu0 %v928
      %938 = vmatpush.bf16.msra.mxu0 %v927
      %939 = vmatpush.bf16.msra.mxu0 %v926
      %940 = vmatpush.bf16.msra.mxu0 %v925
      %941 = vmatpush.bf16.msra.mxu0 %v924
      %942 = vmatpush.bf16.msra.mxu0 %v923
      %943 = vmatpush.bf16.msra.mxu0 %v922
      %944 = vmatpush.bf16.msra.mxu0 %v921
      %945 = vmatmul.bf16.gmra.mxu0 %v885
      %v946 = vpop.f32.mrf.mxu0
      %v947 = vadd.f32 0.0, %v946
      %v948 = vpop.f32.mrf.mxu0
      %v949 = vadd.f32 0.0, %v948
      %950 = vmatmul.bf16.gmra.mxu0 %v886
      %v951 = vpop.f32.mrf.mxu0
      %v952 = vadd.f32 0.0, %v951
      %v953 = vpop.f32.mrf.mxu0
      %v954 = vadd.f32 0.0, %v953
      %955 = vdwg.mxu0
      %v956 = vadd.f32 %v861, %v947
      %v957 = vadd.f32 %v862, %v949
      %v958 = vadd.f32 %v863, %v952
      %v959 = vadd.f32 %v864, %v954
      %v960 = vld [vmem:[%s218 + $0x4] sm:$0xf]
      %v961 = vld [vmem:[%s218 + $0x8] sm:$0xf]
      %v962 = vld [vmem:[%s218 + $0xc] sm:$0xf]
      %v963 = vld [vmem:[%s218 + $0x10] sm:$0xf]
      %s964 = scalar_lea.vmem %s1, 448
      %v965 = vld [vmem:[%s964] sm:$0xf]
      %v966 = vld [vmem:[%s964 + $0x4] sm:$0xf]
      %v967 = vld [vmem:[%s964 + $0x8] sm:$0xf]
      %v968 = vld [vmem:[%s964 + $0xc] sm:$0xf]
      %v969 = vld [vmem:[%s964 + $0x10] sm:$0xf]
      %v970 = vld [vmem:[%s964 + $0x14] sm:$0xf]
      %v971 = vld [vmem:[%s964 + $0x18] sm:$0xf]
      %v972 = vld [vmem:[%s964 + $0x1c] sm:$0xf]
      %v973 = vld [vmem:[%s964 + $0x20] sm:$0xf]
      %v974 = vld [vmem:[%s964 + $0x24] sm:$0xf]
      %v975 = vld [vmem:[%s964 + $0x28] sm:$0xf]
      %v976 = vld [vmem:[%s964 + $0x2c] sm:$0xf]
      %v977 = vld [vmem:[%s964 + $0x30] sm:$0xf]
      %v978 = vld [vmem:[%s964 + $0x34] sm:$0xf]
      %v979 = vld [vmem:[%s964 + $0x38] sm:$0xf]
      %v980 = vld [vmem:[%s964 + $0x3c] sm:$0xf]
      %v985 = vunpack.c.l.b16 %v960
      %v986 = vunpack.c.l.b16 %v961
      %v987 = vunpack.c.l.b16 %v962
      %v988 = vunpack.c.l.b16 %v963
      %v989 = vpack.c.b16 %v986, %v985
      %v990 = vpack.c.b16 %v988, %v987
      %v1009 = vunpack.c.l.b16 %v965
      %v1010 = vunpack.c.l.b16 %v966
      %v1011 = vunpack.c.l.b16 %v967
      %v1012 = vunpack.c.l.b16 %v968
      %v1013 = vunpack.c.l.b16 %v969
      %v1014 = vunpack.c.l.b16 %v970
      %v1015 = vunpack.c.l.b16 %v971
      %v1016 = vunpack.c.l.b16 %v972
      %v1017 = vunpack.c.l.b16 %v973
      %v1018 = vunpack.c.l.b16 %v974
      %v1019 = vunpack.c.l.b16 %v975
      %v1020 = vunpack.c.l.b16 %v976
      %v1021 = vunpack.c.l.b16 %v977
      %v1022 = vunpack.c.l.b16 %v978
      %v1023 = vunpack.c.l.b16 %v979
      %v1024 = vunpack.c.l.b16 %v980
      %v1025 = vpack.c.b16 %v1010, %v1009
      %v1026 = vpack.c.b16 %v1012, %v1011
      %v1027 = vpack.c.b16 %v1014, %v1013
      %v1028 = vpack.c.b16 %v1016, %v1015
      %v1029 = vpack.c.b16 %v1018, %v1017
      %v1030 = vpack.c.b16 %v1020, %v1019
      %v1031 = vpack.c.b16 %v1022, %v1021
      %v1032 = vpack.c.b16 %v1024, %v1023
      %1041 = vmatpush.bf16.msra.mxu0 %v1032
      %1042 = vmatpush.bf16.msra.mxu0 %v1031
      %1043 = vmatpush.bf16.msra.mxu0 %v1030
      %1044 = vmatpush.bf16.msra.mxu0 %v1029
      %1045 = vmatpush.bf16.msra.mxu0 %v1028
      %1046 = vmatpush.bf16.msra.mxu0 %v1027
      %1047 = vmatpush.bf16.msra.mxu0 %v1026
      %1048 = vmatpush.bf16.msra.mxu0 %v1025
      %1049 = vmatmul.bf16.gmra.mxu0 %v989
      %v1050 = vpop.f32.mrf.mxu0
      %v1051 = vadd.f32 0.0, %v1050
      %v1052 = vpop.f32.mrf.mxu0
      %v1053 = vadd.f32 0.0, %v1052
      %1054 = vmatmul.bf16.gmra.mxu0 %v990
      %v1055 = vpop.f32.mrf.mxu0
      %v1056 = vadd.f32 0.0, %v1055
      %v1057 = vpop.f32.mrf.mxu0
      %v1058 = vadd.f32 0.0, %v1057
      %1059 = vdwg.mxu0
      %v1060 = vadd.f32 %v956, %v1051
      %v1061 = vadd.f32 %v957, %v1053
      %v1062 = vadd.f32 %v958, %v1056
      %v1063 = vadd.f32 %v959, %v1058
      %v1064 = vld [vmem:[%s192 + $0x4] sm:$0xf]
      %v1065 = vld [vmem:[%s192 + $0x8] sm:$0xf]
      %v1066 = vld [vmem:[%s192 + $0xc] sm:$0xf]
      %v1067 = vld [vmem:[%s192 + $0x10] sm:$0xf]
      %v1068 = vld [vmem:[%s192 + $0x14] sm:$0x1]
      %s1069 = scalar_lea.vmem %s1, 512
      %v1070 = vld [vmem:[%s1069] sm:$0xf]
      %v1071 = vld [vmem:[%s1069 + $0x4] sm:$0xf]
      %v1072 = vld [vmem:[%s1069 + $0x8] sm:$0xf]
      %v1073 = vld [vmem:[%s1069 + $0xc] sm:$0xf]
      %v1074 = vld [vmem:[%s1069 + $0x10] sm:$0xf]
      %v1075 = vld [vmem:[%s1069 + $0x14] sm:$0xf]
      %v1076 = vld [vmem:[%s1069 + $0x18] sm:$0xf]
      %v1077 = vld [vmem:[%s1069 + $0x1c] sm:$0xf]
      %v1078 = vld [vmem:[%s1069 + $0x20] sm:$0xf]
      %v1079 = vld [vmem:[%s1069 + $0x24] sm:$0xf]
      %v1080 = vld [vmem:[%s1069 + $0x28] sm:$0xf]
      %v1081 = vld [vmem:[%s1069 + $0x2c] sm:$0xf]
      %v1082 = vld [vmem:[%s1069 + $0x30] sm:$0xf]
      %v1083 = vld [vmem:[%s1069 + $0x34] sm:$0xf]
      %v1084 = vld [vmem:[%s1069 + $0x38] sm:$0xf]
      %v1085 = vld [vmem:[%s1069 + $0x3c] sm:$0xf]
      %v1091 = vunpack.c.l.b16 %v1064
      %v1092 = vunpack.c.l.b16 %v1065
      %v1093 = vunpack.c.l.b16 %v1066
      %v1094 = vunpack.c.l.b16 %v1067
      %v1095 = vunpack.c.l.b16 %v1068
      %v1096 = vpack.c.b16 %v1092, %v1091
      %v1097 = vpack.c.b16 %v1094, %v1093
      %v1098 = vpack.c.b16 %v1095, %v1095
      %v1100 = vshrl.u32 %v1096, 16
      %v1102 = vshll.u32 %v1096, 16
      %v1104 = vrot.slane %v1102, 1
      %v1105 = vor.u32 %v1100, %v1104
      %v1107 = vshll.u32 %v1097, 16
      %v1109 = vrot.slane %v1107, 1
      %v1110 = vsel %vm433, %v1105, %v1109
      %v1111 = vshrl.u32 %v1097, 16
      %v1113 = vor.u32 %v1111, %v1109
      %v1115 = vshll.u32 %v1098, 16
      %v1117 = vrot.slane %v1115, 1
      %v1118 = vsel %vm433, %v1113, %v1117
      %v1137 = vunpack.c.l.b16 %v1070
      %v1138 = vunpack.c.l.b16 %v1071
      %v1139 = vunpack.c.l.b16 %v1072
      %v1140 = vunpack.c.l.b16 %v1073
      %v1141 = vunpack.c.l.b16 %v1074
      %v1142 = vunpack.c.l.b16 %v1075
      %v1143 = vunpack.c.l.b16 %v1076
      %v1144 = vunpack.c.l.b16 %v1077
      %v1145 = vunpack.c.l.b16 %v1078
      %v1146 = vunpack.c.l.b16 %v1079
      %v1147 = vunpack.c.l.b16 %v1080
      %v1148 = vunpack.c.l.b16 %v1081
      %v1149 = vunpack.c.l.b16 %v1082
      %v1150 = vunpack.c.l.b16 %v1083
      %v1151 = vunpack.c.l.b16 %v1084
      %v1152 = vunpack.c.l.b16 %v1085
      %v1153 = vpack.c.b16 %v1138, %v1137
      %v1154 = vpack.c.b16 %v1140, %v1139
      %v1155 = vpack.c.b16 %v1142, %v1141
      %v1156 = vpack.c.b16 %v1144, %v1143
      %v1157 = vpack.c.b16 %v1146, %v1145
      %v1158 = vpack.c.b16 %v1148, %v1147
      %v1159 = vpack.c.b16 %v1150, %v1149
      %v1160 = vpack.c.b16 %v1152, %v1151
      %1169 = vmatpush.bf16.msra.mxu0 %v1160
      %1170 = vmatpush.bf16.msra.mxu0 %v1159
      %1171 = vmatpush.bf16.msra.mxu0 %v1158
      %1172 = vmatpush.bf16.msra.mxu0 %v1157
      %1173 = vmatpush.bf16.msra.mxu0 %v1156
      %1174 = vmatpush.bf16.msra.mxu0 %v1155
      %1175 = vmatpush.bf16.msra.mxu0 %v1154
      %1176 = vmatpush.bf16.msra.mxu0 %v1153
      %1177 = vmatmul.bf16.gmra.mxu0 %v1110
      %v1178 = vpop.f32.mrf.mxu0
      %v1179 = vadd.f32 0.0, %v1178
      %v1180 = vpop.f32.mrf.mxu0
      %v1181 = vadd.f32 0.0, %v1180
      %1182 = vmatmul.bf16.gmra.mxu0 %v1118
      %v1183 = vpop.f32.mrf.mxu0
      %v1184 = vadd.f32 0.0, %v1183
      %v1185 = vpop.f32.mrf.mxu0
      %v1186 = vadd.f32 0.0, %v1185
      %1187 = vdwg.mxu0
      %v1188 = vadd.f32 %v1060, %v1179
      %v1189 = vadd.f32 %v1061, %v1181
      %v1190 = vadd.f32 %v1062, %v1184
      %v1191 = vadd.f32 %v1063, %v1186
      %v1192 = vld [vmem:[%s2] sm:$0x1]
      %v1194 = vperm.slane %v1192, 0
      %v1196 = vmul.f32 %v1188, %v1194
      %v1197 = vmul.f32 %v1189, %v1194
      %v1198 = vmul.f32 %v1190, %v1194
      %v1199 = vmul.f32 %v1191, %v1194
      %v1200 = vld [vmem:[%s3] sm:$0x1]
      %v1202 = vperm.slane %v1200, 0
      %v1204 = vadd.f32 %v1196, %v1202
      %v1205 = vadd.f32 %v1197, %v1202
      %v1206 = vadd.f32 %v1198, %v1202
      %v1207 = vadd.f32 %v1199, %v1202
      %v1208 = vmax.f32 %v1204, 0.0
      %v1209 = vmax.f32 %v1205, 0.0
      %v1210 = vmax.f32 %v1206, 0.0
      %v1211 = vmax.f32 %v1207, 0.0
      %v1212 = vpack.c.bf16 %v1208, %v1208
      %v1213 = vpack.c.bf16 %v1209, %v1209
      %v1214 = vpack.c.bf16 %v1210, %v1210
      %v1215 = vpack.c.bf16 %v1211, %v1211
      %1216 = vst [vmem:[%s197] sm:$0xf] %v1212
      %1217 = vst [vmem:[%s197 + $0x4] sm:$0xf] %v1213
      %1218 = vst [vmem:[%s197 + $0x8] sm:$0xf] %v1214
      %1219 = vst [vmem:[%s197 + $0xc] sm:$0xf] %v1215
      %p1220 = scmp.lt.s32.totalorder %s15, 1
      %s1221 = scalar_select %p1220, %s15, 1
      %s1222 = smul.addr %s1221, 4
      %s1223 = smul.addr %s1222, 4
      %s1224 = scalar_lea.vmem %s4, %s1223
      // Predicated region
      $region37: #{_bottleneck_forward.4} parent=35 // pred_check
        %p1225 = pneg %p122
      $region38: #{_bottleneck_forward.4} parent=35 // pred_check_branch
        %1227 = sbr.rel (%p1225) target = $region40
      $region39: #{_bottleneck_forward.4} parent=35 // pred_region
        _
      $region40: #{_bottleneck_forward.4} parent=35 // pred_fallthru
        _
    $region36: #{_bottleneck_forward.4} parent=5 // pred_fallthru
      _
    %p1228 = scmp.le.s32.totalorder 2, %s10
    // Predicated region
    $region41: #{_bottleneck_forward.4} parent=5 // pred_check
      %p1229 = pneg %p1228
    $region42: #{_bottleneck_forward.4} parent=5 // pred_check_branch
      %1231 = sbr.rel (%p1229) target = $region44
    $region43: #{_bottleneck_forward.4} parent=5 // pred_region
      %s1232 = ssub.s32 %s10, 2
      // Predicated region
      $region45: #{_bottleneck_forward.4} parent=43 // pred_check
        %p1233 = pneg %p128
      $region46: #{_bottleneck_forward.4} parent=43 // pred_check_branch
        %1235 = sbr.rel (%p1233) target = $region48
      $region47: #{_bottleneck_forward.4} parent=43 // pred_region
        %p1236 = scmp.lt.s32.totalorder %s16, 1
        %s1237 = scalar_select %p1236, %s16, 1
        %s1238 = smul.addr %s1237, 4
        %s1239 = smul.addr %s1238, 4
        %s1240 = scalar_lea.vmem %s4, %s1239
      $region48: #{_bottleneck_forward.4} parent=43 // pred_fallthru
        _
    $region44: #{_bottleneck_forward.4} parent=5 // pred_fallthru
      _
  $region6: #{_bottleneck_forward.4} parent=0 // loop_footer
    %s14 = sadd.s32 1, %s10
  $region7: #{_bottleneck_forward.4} parent=0 // loop_footer_branch
    %9 = sbr.rel target = $region3
  $region8: #{_bottleneck_forward.4} parent=0 // loop_exit
    _

// kernel: _bottleneck_forward.5
$region0: #{_bottleneck_forward.5}
  #allocation0 [shape = 'u32[]', space=smem, size = 0x4, offset = 0x4, fixed_abs, tag = 'smem constant byte address 0x4 - core index']
  #allocation1 [shape = 'u32[72,128]{1,0:T(1,128)}', space=vmem, size = 0x9000, scoped, tag = 'internal scratch']
  %s0 = inlined_call_operand.vmem [shape: bf16[32,128], index: 0, kind: input, shape index: {}]
  %s1 = inlined_call_operand.vmem [shape: bf16[128,128], index: 1, kind: input, shape index: {}]
  %s2 = inlined_call_operand.vmem [shape: f32[1,128], index: 2, kind: input, shape index: {}]
  %s3 = inlined_call_operand.vmem [shape: f32[1,128], index: 3, kind: input, shape index: {}]
  %s4 = inlined_call_operand.vmem [shape: bf16[32,128], index: 4, kind: input, shape index: {}]
  %s5 = inlined_call_operand.vmem [shape: bf16[128,128], index: 5, kind: input, shape index: {}]
  %s6 = inlined_call_operand.vmem [shape: f32[1,128], index: 6, kind: input, shape index: {}]
  %s7 = inlined_call_operand.vmem [shape: f32[1,128], index: 7, kind: input, shape index: {}]
  %s8 = inlined_call_operand.hbm [shape: f32[32,128], index: 8, kind: output, shape index: {0}]
  %s9 = inlined_call_operand.hbm [shape: f32[32,128], index: 9, kind: output, shape index: {1}]
  %10 = xla_tuple %s8, %s9
  %s11 = sld [smem:[#allocation0]]
  $region50: #{_bottleneck_forward.5} parent=0
    _
  %s13 = ssub.s32 1, %s11
  %s14 = scalar_select 0, %s13, %s11
  $region1: #{_bottleneck_forward.5} parent=0
    #allocation2 [shape = 'u8[16384]{0}', space=vmem, size = 0x4000, scoped, tag = 'output window, operand 0, single buffered']
    #allocation3 [shape = 's32[1]{0}', space=sflag, size = 0x4, scoped, tag = 'scoped memory for _bottleneck_forward.5']
    #allocation4 [shape = 'u8[16384]{0}', space=vmem, size = 0x4000, scoped, tag = 'output window, operand 1, single buffered']
    #allocation5 [shape = 's32[1]{0}', space=sflag, size = 0x4, scoped, tag = 'scoped memory for _bottleneck_forward.5']
    %15 = vsyncpa [#allocation3], 0
    %16 = vsyncpa [#allocation5], 0
    // Predicated region
    $region2: #{_bottleneck_forward.5} parent=1 // pred_check
      _
    $region3: #{_bottleneck_forward.5} parent=1 // pred_check_branch
      %18 = sbr.rel (0) target = $region5
    $region4: #{_bottleneck_forward.5} parent=1 // pred_region
      _
    $region5: #{_bottleneck_forward.5} parent=1 // pred_fallthru
      _
    // Predicated region
    $region6: #{_bottleneck_forward.5} parent=1 // pred_check
      _
    $region7: #{_bottleneck_forward.5} parent=1 // pred_check_branch
      %20 = sbr.rel (0) target = $region9
    $region8: #{_bottleneck_forward.5} parent=1 // pred_region
      _
    $region9: #{_bottleneck_forward.5} parent=1 // pred_fallthru
      _
    // Predicated region
    $region10: #{_bottleneck_forward.5} parent=1 // pred_check
      _
    $region11: #{_bottleneck_forward.5} parent=1 // pred_check_branch
      %22 = sbr.rel (0) target = $region13
    $region12: #{_bottleneck_forward.5} parent=1 // pred_region
      _
    $region13: #{_bottleneck_forward.5} parent=1 // pred_fallthru
      _
    // Predicated region
    $region14: #{_bottleneck_forward.5} parent=1 // pred_check
      _
    $region15: #{_bottleneck_forward.5} parent=1 // pred_check_branch
      %24 = sbr.rel (0) target = $region17
    $region16: #{_bottleneck_forward.5} parent=1 // pred_region
      _
    $region17: #{_bottleneck_forward.5} parent=1 // pred_fallthru
      _
    // Predicated region
    $region18: #{_bottleneck_forward.5} parent=1 // pred_check
      _
    $region19: #{_bottleneck_forward.5} parent=1 // pred_check_branch
      %26 = sbr.rel (0) target = $region21
    $region20: #{_bottleneck_forward.5} parent=1 // pred_region
      _
    $region21: #{_bottleneck_forward.5} parent=1 // pred_fallthru
      _
    // Predicated region
    $region22: #{_bottleneck_forward.5} parent=1 // pred_check
      _
    $region23: #{_bottleneck_forward.5} parent=1 // pred_check_branch
      %28 = sbr.rel (0) target = $region25
    $region24: #{_bottleneck_forward.5} parent=1 // pred_region
      _
    $region25: #{_bottleneck_forward.5} parent=1 // pred_fallthru
      _
    // Predicated region
    $region26: #{_bottleneck_forward.5} parent=1 // pred_check
      _
    $region27: #{_bottleneck_forward.5} parent=1 // pred_check_branch
      %30 = sbr.rel (0) target = $region29
    $region28: #{_bottleneck_forward.5} parent=1 // pred_region
      _
    $region29: #{_bottleneck_forward.5} parent=1 // pred_fallthru
      _
    // Predicated region
    $region30: #{_bottleneck_forward.5} parent=1 // pred_check
      _
    $region31: #{_bottleneck_forward.5} parent=1 // pred_check_branch
      %32 = sbr.rel (0) target = $region33
    $region32: #{_bottleneck_forward.5} parent=1 // pred_region
      _
    $region33: #{_bottleneck_forward.5} parent=1 // pred_fallthru
      _
    %v33 = vld [vmem:[%s0] sm:$0xf]
    %v34 = vld [vmem:[%s0 + $0x4] sm:$0xf]
    %v35 = vld [vmem:[%s0 + $0x8] sm:$0xf]
    %v36 = vld [vmem:[%s0 + $0xc] sm:$0xf]
    %v37 = vld [vmem:[%s1] sm:$0xf]
    %v38 = vld [vmem:[%s1 + $0x4] sm:$0xf]
    %v39 = vld [vmem:[%s1 + $0x8] sm:$0xf]
    %v40 = vld [vmem:[%s1 + $0xc] sm:$0xf]
    %v41 = vld [vmem:[%s1 + $0x10] sm:$0xf]
    %v42 = vld [vmem:[%s1 + $0x14] sm:$0xf]
    %v43 = vld [vmem:[%s1 + $0x18] sm:$0xf]
    %v44 = vld [vmem:[%s1 + $0x1c] sm:$0xf]
    %v45 = vld [vmem:[%s1 + $0x20] sm:$0xf]
    %v46 = vld [vmem:[%s1 + $0x24] sm:$0xf]
    %v47 = vld [vmem:[%s1 + $0x28] sm:$0xf]
    %v48 = vld [vmem:[%s1 + $0x2c] sm:$0xf]
    %v49 = vld [vmem:[%s1 + $0x30] sm:$0xf]
    %v50 = vld [vmem:[%s1 + $0x34] sm:$0xf]
    %v51 = vld [vmem:[%s1 + $0x38] sm:$0xf]
    %v52 = vld [vmem:[%s1 + $0x3c] sm:$0xf]
    %v57 = vunpack.c.l.b16 %v33
    %v58 = vunpack.c.l.b16 %v34
    %v59 = vunpack.c.l.b16 %v35
    %v60 = vunpack.c.l.b16 %v36
    %v61 = vpack.c.b16 %v58, %v57
    %v62 = vpack.c.b16 %v60, %v59
    %v81 = vunpack.c.l.b16 %v37
    %v82 = vunpack.c.l.b16 %v38
    %v83 = vunpack.c.l.b16 %v39
    %v84 = vunpack.c.l.b16 %v40
    %v85 = vunpack.c.l.b16 %v41
    %v86 = vunpack.c.l.b16 %v42
    %v87 = vunpack.c.l.b16 %v43
    %v88 = vunpack.c.l.b16 %v44
    %v89 = vunpack.c.l.b16 %v45
    %v90 = vunpack.c.l.b16 %v46
    %v91 = vunpack.c.l.b16 %v47
    %v92 = vunpack.c.l.b16 %v48
    %v93 = vunpack.c.l.b16 %v49
    %v94 = vunpack.c.l.b16 %v50
    %v95 = vunpack.c.l.b16 %v51
    %v96 = vunpack.c.l.b16 %v52
    %v97 = vpack.c.b16 %v82, %v81
    %v98 = vpack.c.b16 %v84, %v83
    %v99 = vpack.c.b16 %v86, %v85
    %v100 = vpack.c.b16 %v88, %v87
    %v101 = vpack.c.b16 %v90, %v89
    %v102 = vpack.c.b16 %v92, %v91
    %v103 = vpack.c.b16 %v94, %v93
    %v104 = vpack.c.b16 %v96, %v95
    %113 = vmatpush.bf16.msra.mxu0 %v104
    %114 = vmatpush.bf16.msra.mxu0 %v103
    %115 = vmatpush.bf16.msra.mxu0 %v102
    %116 = vmatpush.bf16.msra.mxu0 %v101
    %117 = vmatpush.bf16.msra.mxu0 %v100
    %118 = vmatpush.bf16.msra.mxu0 %v99
    %119 = vmatpush.bf16.msra.mxu0 %v98
    %120 = vmatpush.bf16.msra.mxu0 %v97
    %121 = vmatmul.bf16.gmra.mxu0 %v61
    %v122 = vpop.f32.mrf.mxu0
    %v123 = vadd.f32 0.0, %v122
    %v124 = vpop.f32.mrf.mxu0
    %v125 = vadd.f32 0.0, %v124
    %126 = vmatmul.bf16.gmra.mxu0 %v62
    %v127 = vpop.f32.mrf.mxu0
    %v128 = vadd.f32 0.0, %v127
    %v129 = vpop.f32.mrf.mxu0
    %v130 = vadd.f32 0.0, %v129
    %131 = vdwg.mxu0
    %v132 = vld [vmem:[%s2] sm:$0x1]
    %v134 = vperm.slane %v132, 0
    %v136 = vmul.f32 %v123, %v134
    %v137 = vmul.f32 %v125, %v134
    %v138 = vmul.f32 %v128, %v134
    %v139 = vmul.f32 %v130, %v134
    %v140 = vld [vmem:[%s3] sm:$0x1]
    %v142 = vperm.slane %v140, 0
    %v144 = vadd.f32 %v136, %v142
    %v145 = vadd.f32 %v137, %v142
    %v146 = vadd.f32 %v138, %v142
    %v147 = vadd.f32 %v139, %v142
    %v148 = vld [vmem:[%s4] sm:$0xf]
    %v149 = vld [vmem:[%s4 + $0x4] sm:$0xf]
    %v150 = vld [vmem:[%s4 + $0x8] sm:$0xf]
    %v151 = vld [vmem:[%s4 + $0xc] sm:$0xf]
    %v152 = vld [vmem:[%s5] sm:$0xf]
    %v153 = vld [vmem:[%s5 + $0x4] sm:$0xf]
    %v154 = vld [vmem:[%s5 + $0x8] sm:$0xf]
    %v155 = vld [vmem:[%s5 + $0xc] sm:$0xf]
    %v156 = vld [vmem:[%s5 + $0x10] sm:$0xf]
    %v157 = vld [vmem:[%s5 + $0x14] sm:$0xf]
    %v158 = vld [vmem:[%s5 + $0x18] sm:$0xf]
    %v159 = vld [vmem:[%s5 + $0x1c] sm:$0xf]
    %v160 = vld [vmem:[%s5 + $0x20] sm:$0xf]
    %v161 = vld [vmem:[%s5 + $0x24] sm:$0xf]
    %v162 = vld [vmem:[%s5 + $0x28] sm:$0xf]
    %v163 = vld [vmem:[%s5 + $0x2c] sm:$0xf]
    %v164 = vld [vmem:[%s5 + $0x30] sm:$0xf]
    %v165 = vld [vmem:[%s5 + $0x34] sm:$0xf]
    %v166 = vld [vmem:[%s5 + $0x38] sm:$0xf]
    %v167 = vld [vmem:[%s5 + $0x3c] sm:$0xf]
    %v172 = vunpack.c.l.b16 %v148
    %v173 = vunpack.c.l.b16 %v149
    %v174 = vunpack.c.l.b16 %v150
    %v175 = vunpack.c.l.b16 %v151
    %v176 = vpack.c.b16 %v173, %v172
    %v177 = vpack.c.b16 %v175, %v174
    %v196 = vunpack.c.l.b16 %v152
    %v197 = vunpack.c.l.b16 %v153
    %v198 = vunpack.c.l.b16 %v154
    %v199 = vunpack.c.l.b16 %v155
    %v200 = vunpack.c.l.b16 %v156
    %v201 = vunpack.c.l.b16 %v157
    %v202 = vunpack.c.l.b16 %v158
    %v203 = vunpack.c.l.b16 %v159
    %v204 = vunpack.c.l.b16 %v160
    %v205 = vunpack.c.l.b16 %v161
    %v206 = vunpack.c.l.b16 %v162
    %v207 = vunpack.c.l.b16 %v163
    %v208 = vunpack.c.l.b16 %v164
    %v209 = vunpack.c.l.b16 %v165
    %v210 = vunpack.c.l.b16 %v166
    %v211 = vunpack.c.l.b16 %v167
    %v212 = vpack.c.b16 %v197, %v196
    %v213 = vpack.c.b16 %v199, %v198
    %v214 = vpack.c.b16 %v201, %v200
    %v215 = vpack.c.b16 %v203, %v202
    %v216 = vpack.c.b16 %v205, %v204
    %v217 = vpack.c.b16 %v207, %v206
    %v218 = vpack.c.b16 %v209, %v208
    %v219 = vpack.c.b16 %v211, %v210
    %228 = vmatpush.bf16.msra.mxu0 %v219
    %229 = vmatpush.bf16.msra.mxu0 %v218
    %230 = vmatpush.bf16.msra.mxu0 %v217
    %231 = vmatpush.bf16.msra.mxu0 %v216
    %232 = vmatpush.bf16.msra.mxu0 %v215
    %233 = vmatpush.bf16.msra.mxu0 %v214
    %234 = vmatpush.bf16.msra.mxu0 %v213
    %235 = vmatpush.bf16.msra.mxu0 %v212
    %236 = vmatmul.bf16.gmra.mxu0 %v176
    %v237 = vpop.f32.mrf.mxu0
    %v238 = vadd.f32 0.0, %v237
    %v239 = vpop.f32.mrf.mxu0
    %v240 = vadd.f32 0.0, %v239
    %241 = vmatmul.bf16.gmra.mxu0 %v177
    %v242 = vpop.f32.mrf.mxu0
    %v243 = vadd.f32 0.0, %v242
    %v244 = vpop.f32.mrf.mxu0
    %v245 = vadd.f32 0.0, %v244
    %246 = vdwg.mxu0
    %v247 = vld [vmem:[%s6] sm:$0x1]
    %v249 = vperm.slane %v247, 0
    %v251 = vmul.f32 %v238, %v249
    %v252 = vmul.f32 %v240, %v249
    %v253 = vmul.f32 %v243, %v249
    %v254 = vmul.f32 %v245, %v249
    %v255 = vadd.f32 %v144, %v251
    %v256 = vadd.f32 %v145, %v252
    %v257 = vadd.f32 %v146, %v253
    %v258 = vadd.f32 %v147, %v254
    %v259 = vld [vmem:[%s7] sm:$0x1]
    %v261 = vperm.slane %v259, 0
    %v263 = vadd.f32 %v255, %v261
    %v264 = vadd.f32 %v256, %v261
    %v265 = vadd.f32 %v257, %v261
    %v266 = vadd.f32 %v258, %v261
    %267 = vst [vmem:[#allocation4] sm:$0xff] %v263
    %268 = vst [vmem:[#allocation4 + $0x8] sm:$0xff] %v264
    %269 = vst [vmem:[#allocation4 + $0x10] sm:$0xff] %v265
    %270 = vst [vmem:[#allocation4 + $0x18] sm:$0xff] %v266
    %v271 = vmax.f32 %v263, 0.0
    %v272 = vmax.f32 %v264, 0.0
    %v273 = vmax.f32 %v265, 0.0
    %v274 = vmax.f32 %v266, 0.0
    %275 = vst [vmem:[#allocation2] sm:$0xff] %v271
    %276 = vst [vmem:[#allocation2 + $0x8] sm:$0xff] %v272
    %277 = vst [vmem:[#allocation2 + $0x10] sm:$0xff] %v273
    %278 = vst [vmem:[#allocation2 + $0x18] sm:$0xff] %v274
    // Predicated region
    $region34: #{_bottleneck_forward.5} parent=1 // pred_check
      _
    $region35: #{_bottleneck_forward.5} parent=1 // pred_check_branch
      %280 = sbr.rel (0) target = $region37
    $region36: #{_bottleneck_forward.5} parent=1 // pred_region
      %282 = vsyncadd [#allocation3], 0
      %s283 = sshll.u32 [#allocation2], 4
      %s284 = int_to_ptr.vmem [resolvable:$true] %s283
      %s285 = sshll.u32 %s8, 4
      %s286 = int_to_ptr.hbm [resolvable:$true] %s285
      %291 = dma.vmem_to_hbm [thread:$0]  %s284, 512, %s286, [#allocation3], 128, 128, 8
    $region37: #{_bottleneck_forward.5} parent=1 // pred_fallthru
      _
    // Predicated region
    $region38: #{_bottleneck_forward.5} parent=1 // pred_check
      _
    $region39: #{_bottleneck_forward.5} parent=1 // pred_check_branch
      %293 = sbr.rel (0) target = $region41
    $region40: #{_bottleneck_forward.5} parent=1 // pred_region
      %295 = vsyncadd [#allocation5], 0
      %s296 = sshll.u32 [#allocation4], 4
      %s297 = int_to_ptr.vmem [resolvable:$true] %s296
      %s298 = sshll.u32 %s9, 4
      %s299 = int_to_ptr.hbm [resolvable:$true] %s298
      %304 = dma.vmem_to_hbm [thread:$0]  %s297, 512, %s299, [#allocation5], 128, 128, 8
    $region41: #{_bottleneck_forward.5} parent=1 // pred_fallthru
      _
    // Predicated region
    $region42: #{_bottleneck_forward.5} parent=1 // pred_check
      _
    $region43: #{_bottleneck_forward.5} parent=1 // pred_check_branch
      %306 = sbr.rel (0) target = $region45
    $region44: #{_bottleneck_forward.5} parent=1 // pred_region
      %308 = dma.done [#allocation3], 512
    $region45: #{_bottleneck_forward.5} parent=1 // pred_fallthru
      _
    // Predicated region
    $region46: #{_bottleneck_forward.5} parent=1 // pred_check
      _
    $region47: #{_bottleneck_forward.5} parent=1 // pred_check_branch
      %310 = sbr.rel (0) target = $region49
    $region48: #{_bottleneck_forward.5} parent=1 // pred_region
      %312 = dma.done [#allocation5], 512
    $region49: #{_bottleneck_forward.5} parent=1 // pred_fallthru
      _
    %313 = vsyncpa [#allocation3], 1
    %314 = vsyncpa [#allocation5], 1

</llo_original>
